<compile_context>
chip_gen: v7x
topology: tpu7x:2x2x1
jax: 0.10.0
libtpu: 0.0.40
codegen_flags: <defaults>
</compile_context>

<pallas_src>
import jax
import jax.numpy as jnp
from jax.experimental import pallas as pl
from jax.experimental.pallas import tpu as pltpu

# ----------------------------- configuration --------------------------------
OBS_DIM     = 9
ENC_H       = 64
FEAT        = 128
HIDDEN      = 32            # hidden_dim
H2          = HIDDEN // 2   # hidden_dim // 2
NUM_ACTIONS = 4
KEY_DIM     = 16            # dict_key_dim
DICT_LEN    = 8             # dict_len
NG          = 5             # i, f, o, r gates + candidate g
GP          = 128           # per-gate lane padding (one full vreg width)

# --- vec slab rows (dynamic per-step inputs, packed (8,128)) -----------------
VEC_OBS, VEC_X1E, VEC_C1, VEC_X2E, VEC_C2, VEC_CUE = 0, 1, 2, 3, 4, 5
REW_LANE, ONE1_LANE, H1_LANE = 0, 1, 8          # layout inside vec row VEC_X1E
ACT_LANE, ONE2_LANE, H2_LANE = 0, 4, 8          # layout inside vec row VEC_X2E

# --- misc slab row offsets (static params, packed (536,128)) -----------------
MISC_ENC1  = 0      # (128,128)  encoder layer-1 weights (+bias row, + bias-one carrier)
MISC_ENC2  = 128    # (128,128)  encoder layer-2 weights (+bias row)
MISC_KEYS  = 256    # (128,128)  [2*K1^T | 2*K2^T] rows 0..15, row 16 = [-|k1|^2 | -|k2|^2]
MISC_VALS1 = 384    # (8,128)    DND-1 values (cols 0..HIDDEN-1)
MISC_VALS2 = 392    # (8,128)    DND-2 values (cols 0..H2-1)
MISC_HEADW = 400    # (128,128)  fused actor(cols 0..3) + critic(col 4) weights
MISC_HEADB = 528    # (1,128)    fused head bias
MISC_ROWS  = 536

# --- packed output rows ------------------------------------------------------
OUT_HEADS, OUT_H1, OUT_C1, OUT_H2, OUT_C2 = 0, 1, 2, 3, 4


# ------------------------------- the kernel ---------------------------------
def a3c_dnd_kernel(vec_ref, w1_ref, w2_ref, misc_ref, out_ref):
    f32 = jnp.float32
    dot = lambda a, b: jnp.dot(a, b, preferred_element_type=f32)
    sig = jax.nn.sigmoid

    obs_row  = vec_ref[pl.ds(VEC_OBS, 1), :]     # (1,128) obs | 1.0 bias lane
    x1_extra = vec_ref[pl.ds(VEC_X1E, 1), :]     # (1,128) p_reward | 1.0 | h1
    c1_row   = vec_ref[pl.ds(VEC_C1, 1), :]      # (1,128) c1 padded
    x2_extra = vec_ref[pl.ds(VEC_X2E, 1), :]     # (1,128) p_action | 1.0 | h2
    c2_row   = vec_ref[pl.ds(VEC_C2, 1), :]      # (1,128) c2 padded
    cue_row  = vec_ref[pl.ds(VEC_CUE, 1), :]     # (1,128) cue | 1.0 bias lane

    # --- encoder: biases folded in via the carried 1.0 lanes (ReLU keeps them) ----
    z1    = jnp.maximum(dot(obs_row, misc_ref[pl.ds(MISC_ENC1, GP), :]), 0.0)   # (1,128)
    feats = jnp.maximum(dot(z1,      misc_ref[pl.ds(MISC_ENC2, GP), :]), 0.0)   # (1,128)

    # --- DND soft l2-kernel retrieval, lane-oriented (one key matmul for both banks) ---
    # sims lane j: 2*cue.k_j - |k_j|^2  (equals -|cue-k_j|^2 up to a constant -> same softmax)
    sims = dot(cue_row, misc_ref[pl.ds(MISC_KEYS, GP), :])                      # (1,128)

    def soft_read(s, vals):                       # s: (1, DICT_LEN), vals: (DICT_LEN, 128)
        mx = jnp.max(s, axis=-1, keepdims=True)
        e  = jnp.exp(s - mx)
        w  = e * pl.reciprocal(jnp.sum(e, axis=-1, keepdims=True), approx=True)
        return dot(w, vals)                       # (1,128) lane-padded read

    m1 = soft_read(sims[:, 0:DICT_LEN],              misc_ref[pl.ds(MISC_VALS1, DICT_LEN), :])
    m2 = soft_read(sims[:, DICT_LEN:2 * DICT_LEN],   misc_ref[pl.ds(MISC_VALS2, DICT_LEN), :])

    # --- EpLSTM layer 1: single fused matmul, 128-padded gate blocks --------------
    pre1 = dot(jnp.concatenate([feats, x1_extra], axis=-1), w1_ref[...])        # (1, 5*128)
    i1 = sig(pre1[:, 0 * GP:1 * GP]); f1 = sig(pre1[:, 1 * GP:2 * GP])
    o1 = sig(pre1[:, 2 * GP:3 * GP]); r1 = sig(pre1[:, 3 * GP:4 * GP])
    g1 = jnp.tanh(pre1[:, 4 * GP:5 * GP])
    c1n = f1 * c1_row + i1 * g1 + r1 * m1
    h1n = o1 * jnp.tanh(c1n)                                                    # (1,128)

    # --- EpLSTM layer 2: single fused matmul ---------------------------------------
    pre2 = dot(jnp.concatenate([h1n, feats, x2_extra], axis=-1), w2_ref[...])   # (1, 5*128)
    i2 = sig(pre2[:, 0 * GP:1 * GP]); f2 = sig(pre2[:, 1 * GP:2 * GP])
    o2 = sig(pre2[:, 2 * GP:3 * GP]); r2 = sig(pre2[:, 3 * GP:4 * GP])
    g2 = jnp.tanh(pre2[:, 4 * GP:5 * GP])
    c2n = f2 * c2_row + i2 * g2 + r2 * m2
    h2n = o2 * jnp.tanh(c2n)                                                    # (1,128)

    # --- fused actor + critic head (logits lanes 0..3, value lane 4) ---------------
    heads = dot(h2n, misc_ref[pl.ds(MISC_HEADW, GP), :]) + misc_ref[pl.ds(MISC_HEADB, 1), :]

    # --- single packed, lane-dense output slab (one writeback DMA) -----------------
    out_ref[pl.ds(OUT_HEADS, 1), :] = heads
    out_ref[pl.ds(OUT_H1, 1), :]    = h1n
    out_ref[pl.ds(OUT_C1, 1), :]    = c1n
    out_ref[pl.ds(OUT_H2, 1), :]    = h2n
    out_ref[pl.ds(OUT_C2, 1), :]    = c2n
    out_ref[pl.ds(5, 3), :]         = jnp.zeros((3, GP), f32)


# ------------------------------- wrapper -------------------------------------
def _pack_step_inputs(obs, p_action, p_reward, cue, h1, c1, h2, c2):
    """Pack all dynamic per-step vectors into one (8,128) slab (one DMA)."""
    f32 = jnp.float32
    vec = jnp.zeros((8, GP), f32)
    vec = vec.at[VEC_OBS, 0:OBS_DIM].set(obs.reshape(OBS_DIM))
    vec = vec.at[VEC_OBS, OBS_DIM].set(1.0)                       # encoder bias carrier
    vec = vec.at[VEC_X1E, REW_LANE].set(p_reward.reshape(()))
    vec = vec.at[VEC_X1E, ONE1_LANE].set(1.0)                     # LSTM-1 bias carrier
    vec = vec.at[VEC_X1E, H1_LANE:H1_LANE + HIDDEN].set(h1.reshape(HIDDEN))
    vec = vec.at[VEC_C1, 0:HIDDEN].set(c1.reshape(HIDDEN))
    vec = vec.at[VEC_X2E, ACT_LANE:ACT_LANE + NUM_ACTIONS].set(p_action.reshape(NUM_ACTIONS))
    vec = vec.at[VEC_X2E, ONE2_LANE].set(1.0)                     # LSTM-2 bias carrier
    vec = vec.at[VEC_X2E, H2_LANE:H2_LANE + H2].set(h2.reshape(H2))
    vec = vec.at[VEC_C2, 0:H2].set(c2.reshape(H2))
    vec = vec.at[VEC_CUE, 0:KEY_DIM].set(cue.reshape(KEY_DIM))
    vec = vec.at[VEC_CUE, KEY_DIM].set(1.0)                       # -|k|^2 bias carrier
    return vec


def a3c_dnd_forward(obs, p_action, p_reward, cue, state_1, state_2, packed):
    """obs:(1,9) p_action:(1,A) p_reward:(1,1) cue:(1,K); state_i=(h,c) each (1,1,H_i)."""
    w1f, w2f, misc = packed
    vec = _pack_step_inputs(obs, p_action, p_reward, cue,
                            state_1[0], state_1[1], state_2[0], state_2[1])

    vmem = pltpu.MemorySpace.VMEM
    out = pl.pallas_call(
        a3c_dnd_kernel,
        out_shape=jax.ShapeDtypeStruct((8, GP), jnp.float32),
        in_specs=[pl.BlockSpec(memory_space=vmem)] * 4,
        out_specs=pl.BlockSpec(memory_space=vmem),
    )(vec, w1f, w2f, misc)

    logits = out[OUT_HEADS, 0:NUM_ACTIONS].reshape(1, 1, NUM_ACTIONS)
    value  = out[OUT_HEADS, NUM_ACTIONS:NUM_ACTIONS + 1].reshape(1, 1, 1)
    h1n    = out[OUT_H1, 0:HIDDEN].reshape(1, 1, HIDDEN)
    c1n    = out[OUT_C1, 0:HIDDEN].reshape(1, 1, HIDDEN)
    h2n    = out[OUT_H2, 0:H2].reshape(1, 1, H2)
    c2n    = out[OUT_C2, 0:H2].reshape(1, 1, H2)
    return logits, value, (h1n, c1n), (h2n, c2n)


# --------------------------- deterministic params ----------------------------
def init_params(seed=0):
    keys = jax.random.split(jax.random.PRNGKey(seed), 20)
    k = iter(keys)
    f32 = jnp.float32
    u = lambda kk, shape, s: (jax.random.uniform(kk, shape, f32, -1.0, 1.0) * s)

    p = {}
    # encoder ([in, out] layout)
    p["enc_w1"] = u(next(k), (OBS_DIM, ENC_H), 1.0 / jnp.sqrt(OBS_DIM))
    p["enc_b1"] = jnp.zeros((1, ENC_H), f32)
    p["enc_w2"] = u(next(k), (ENC_H, FEAT), 1.0 / jnp.sqrt(ENC_H))
    p["enc_b2"] = jnp.zeros((1, FEAT), f32)
    # EpLSTM 1: input = [feats(128), p_reward(1)], hidden = HIDDEN, 5 gate blocks
    s1 = 1.0 / jnp.sqrt(HIDDEN)
    p["w1_feat"] = u(next(k), (FEAT, NG * HIDDEN), s1)
    p["w1_rew"]  = u(next(k), (1, NG * HIDDEN), s1)
    p["w1_h"]    = u(next(k), (HIDDEN, NG * HIDDEN), s1)
    p["b1"]      = u(next(k), (1, NG * HIDDEN), s1)
    # EpLSTM 2: input = [h1(HIDDEN), feats(128), p_action(A)], hidden = H2
    s2 = 1.0 / jnp.sqrt(H2)
    p["w2_h1"]   = u(next(k), (HIDDEN, NG * H2), s2)
    p["w2_feat"] = u(next(k), (FEAT, NG * H2), s2)
    p["w2_act"]  = u(next(k), (NUM_ACTIONS, NG * H2), s2)
    p["w2_h"]    = u(next(k), (H2, NG * H2), s2)
    p["b2"]      = u(next(k), (1, NG * H2), s2)
    # heads (orthogonal-ish init replaced by scaled normal; zero bias as in reset_parameters)
    p["actor_w"]  = jax.random.normal(next(k), (H2, NUM_ACTIONS), f32) * 0.01
    p["actor_b"]  = jnp.zeros((1, NUM_ACTIONS), f32)
    p["critic_w"] = jax.random.normal(next(k), (H2, 1), f32) * 1.0
    p["critic_b"] = jnp.zeros((1, 1), f32)
    # DND memory banks (deterministic synthetic contents)
    p["keys1"] = 0.5 * jax.random.normal(next(k), (DICT_LEN, KEY_DIM), f32)
    p["vals1"] = jax.random.normal(next(k), (DICT_LEN, HIDDEN), f32)
    p["keys2"] = 0.5 * jax.random.normal(next(k), (DICT_LEN, KEY_DIM), f32)
    p["vals2"] = jax.random.normal(next(k), (DICT_LEN, H2), f32)
    return p


def pack_params(p):
    """Fold biases into the weight matrices and pack everything into 3 slabs (done once)."""
    f32 = jnp.float32

    # fused EpLSTM-1 weight: x1 = [feats(128) | p_reward,1,h1(128)]  ->  (256, 5*128)
    w1f = jnp.zeros((2 * GP, NG * GP), f32)
    for g in range(NG):
        c0 = g * GP
        w1f = w1f.at[0:FEAT, c0:c0 + HIDDEN].set(p["w1_feat"][:, g * HIDDEN:(g + 1) * HIDDEN])
        w1f = w1f.at[GP + REW_LANE, c0:c0 + HIDDEN].set(p["w1_rew"][0, g * HIDDEN:(g + 1) * HIDDEN])
        w1f = w1f.at[GP + ONE1_LANE, c0:c0 + HIDDEN].set(p["b1"][0, g * HIDDEN:(g + 1) * HIDDEN])
        w1f = w1f.at[GP + H1_LANE:GP + H1_LANE + HIDDEN,
                     c0:c0 + HIDDEN].set(p["w1_h"][:, g * HIDDEN:(g + 1) * HIDDEN])

    # fused EpLSTM-2 weight: x2 = [h1'(128) | feats(128) | p_action,1,h2(128)]  ->  (384, 5*128)
    w2f = jnp.zeros((3 * GP, NG * GP), f32)
    for g in range(NG):
        c0 = g * GP
        w2f = w2f.at[0:HIDDEN, c0:c0 + H2].set(p["w2_h1"][:, g * H2:(g + 1) * H2])
        w2f = w2f.at[GP:GP + FEAT, c0:c0 + H2].set(p["w2_feat"][:, g * H2:(g + 1) * H2])
        w2f = w2f.at[2 * GP + ACT_LANE:2 * GP + ACT_LANE + NUM_ACTIONS,
                     c0:c0 + H2].set(p["w2_act"][:, g * H2:(g + 1) * H2])
        w2f = w2f.at[2 * GP + ONE2_LANE, c0:c0 + H2].set(p["b2"][0, g * H2:(g + 1) * H2])
        w2f = w2f.at[2 * GP + H2_LANE:2 * GP + H2_LANE + H2,
                     c0:c0 + H2].set(p["w2_h"][:, g * H2:(g + 1) * H2])

    # misc slab: encoder, DND keys/values, fused head
    misc = jnp.zeros((MISC_ROWS, GP), f32)
    misc = misc.at[MISC_ENC1:MISC_ENC1 + OBS_DIM, 0:ENC_H].set(p["enc_w1"])
    misc = misc.at[MISC_ENC1 + OBS_DIM, 0:ENC_H].set(p["enc_b1"][0])
    misc = misc.at[MISC_ENC1 + OBS_DIM, ENC_H].set(1.0)            # carries 1.0 into z1 lane 64
    misc = misc.at[MISC_ENC2:MISC_ENC2 + ENC_H, 0:FEAT].set(p["enc_w2"])
    misc = misc.at[MISC_ENC2 + ENC_H, 0:FEAT].set(p["enc_b2"][0])
    misc = misc.at[MISC_KEYS:MISC_KEYS + KEY_DIM, 0:DICT_LEN].set(2.0 * p["keys1"].T)
    misc = misc.at[MISC_KEYS:MISC_KEYS + KEY_DIM, DICT_LEN:2 * DICT_LEN].set(2.0 * p["keys2"].T)
    misc = misc.at[MISC_KEYS + KEY_DIM, 0:DICT_LEN].set(-jnp.sum(p["keys1"] ** 2, axis=1))
    misc = misc.at[MISC_KEYS + KEY_DIM, DICT_LEN:2 * DICT_LEN].set(-jnp.sum(p["keys2"] ** 2, axis=1))
    misc = misc.at[MISC_VALS1:MISC_VALS1 + DICT_LEN, 0:HIDDEN].set(p["vals1"])
    misc = misc.at[MISC_VALS2:MISC_VALS2 + DICT_LEN, 0:H2].set(p["vals2"])
    misc = misc.at[MISC_HEADW:MISC_HEADW + H2, 0:NUM_ACTIONS].set(p["actor_w"])
    misc = misc.at[MISC_HEADW:MISC_HEADW + H2, NUM_ACTIONS].set(p["critic_w"][:, 0])
    misc = misc.at[MISC_HEADB, 0:NUM_ACTIONS].set(p["actor_b"][0])
    misc = misc.at[MISC_HEADB, NUM_ACTIONS].set(p["critic_b"][0, 0])
    return w1f, w2f, misc


# --------------------------- pure-JAX reference ------------------------------
def reference_forward(obs, p_action, p_reward, cue, state_1, state_2, p):
    relu, sig = jax.nn.relu, jax.nn.sigmoid
    z1 = relu(obs @ p["enc_w1"] + p["enc_b1"])
    feats = relu(z1 @ p["enc_w2"] + p["enc_b2"])

    def dnd(keys, vals):
        d = cue - keys
        w = jax.nn.softmax(-jnp.sum(d * d, axis=1))
        return w[None, :] @ vals

    m1 = dnd(p["keys1"], p["vals1"])
    m2 = dnd(p["keys2"], p["vals2"])
    h1, c1 = state_1[0].reshape(1, HIDDEN), state_1[1].reshape(1, HIDDEN)
    h2, c2 = state_2[0].reshape(1, H2), state_2[1].reshape(1, H2)

    def gates(pre, H):
        return (sig(pre[:, 0:H]), sig(pre[:, H:2 * H]), sig(pre[:, 2 * H:3 * H]),
                sig(pre[:, 3 * H:4 * H]), jnp.tanh(pre[:, 4 * H:5 * H]))

    pre1 = feats @ p["w1_feat"] + p_reward * p["w1_rew"] + h1 @ p["w1_h"] + p["b1"]
    i1, f1, o1, r1, g1 = gates(pre1, HIDDEN)
    c1n = f1 * c1 + i1 * g1 + r1 * m1
    h1n = o1 * jnp.tanh(c1n)

    pre2 = (h1n @ p["w2_h1"] + feats @ p["w2_feat"] + p_action @ p["w2_act"]
            + h2 @ p["w2_h"] + p["b2"])
    i2, f2, o2, r2, g2 = gates(pre2, H2)
    c2n = f2 * c2 + i2 * g2 + r2 * m2
    h2n = o2 * jnp.tanh(c2n)

    logits = h2n @ p["actor_w"] + p["actor_b"]
    value = h2n @ p["critic_w"] + p["critic_b"]
    return logits, value, (h1n, c1n), (h2n, c2n)


# ---------------------------------- main -------------------------------------
if __name__ == "__main__":
    params = init_params(seed=0)
    packed = pack_params(params)

    ik = jax.random.split(jax.random.PRNGKey(0), 8)
    obs      = jax.random.normal(ik[0], (1, OBS_DIM), jnp.float32)
    p_action = jax.nn.one_hot(jnp.array([1]), NUM_ACTIONS, dtype=jnp.float32)   # (1, A)
    p_reward = jax.random.normal(ik[1], (1, 1), jnp.float32)
    cue      = 0.5 * jax.random.normal(ik[2], (1, KEY_DIM), jnp.float32)

    # get_init_states() would be zeros; use small random states to exercise the recurrent paths.
    state_1 = (0.3 * jax.random.normal(ik[3], (1, 1, HIDDEN), jnp.float32),
               0.3 * jax.random.normal(ik[4], (1, 1, HIDDEN), jnp.float32))
    state_2 = (0.3 * jax.random.normal(ik[5], (1, 1, H2), jnp.float32),
               0.3 * jax.random.normal(ik[6], (1, 1, H2), jnp.float32))

    fwd = jax.jit(a3c_dnd_forward)
    out = fwd(obs, p_action, p_reward, cue, state_1, state_2, packed)
    out = jax.block_until_ready(out)

    logits, value, (h1n, c1n), (h2n, c2n) = out
    assert logits.shape == (1, 1, NUM_ACTIONS)
    assert value.shape == (1, 1, 1)
    assert h1n.shape == (1, 1, HIDDEN) and c1n.shape == (1, 1, HIDDEN)
    assert h2n.shape == (1, 1, H2) and c2n.shape == (1, 1, H2)
    assert all(bool(jnp.all(jnp.isfinite(x))) for x in (logits, value, h1n, c1n, h2n, c2n))

    # loose sanity check against a pure-JAX reference (tolerance covers MXU/EUP precision)
    rl, rv, (rh1, rc1), (rh2, rc2) = reference_forward(
        obs, p_action, p_reward, cue, state_1, state_2, params)
    for a, b in ((logits, rl), (value, rv), (h1n, rh1), (c1n, rc1), (h2n, rh2), (c2n, rc2)):
        assert float(jnp.max(jnp.abs(a.reshape(-1) - b.reshape(-1)))) < 1e-1

    print("KERNEL_OK")
</pallas_src>

<mosaic_0001>
module attributes {stable_mosaic.version = 11 : i64} {
  func.func @a3c_dnd_kernel(%arg0: memref<8x128xf32, #tpu.memory_space<vmem>>, %arg1: memref<256x640xf32, #tpu.memory_space<vmem>>, %arg2: memref<384x640xf32, #tpu.memory_space<vmem>>, %arg3: memref<536x128xf32, #tpu.memory_space<vmem>>, %arg4: memref<8x128xf32, #tpu.memory_space<vmem>>) attributes {dimension_semantics = [], scalar_prefetch = 0 : i64, scratch_operands = 0 : i64, tpu.core_type = #tpu.core_type<tc>} {
    %c0 = arith.constant 0 : index
    %c0_0 = arith.constant 0 : index
    %0 = vector.load %arg0[%c0, %c0_0] : memref<8x128xf32, #tpu.memory_space<vmem>>, vector<1x128xf32>
    %c1 = arith.constant 1 : index
    %c0_1 = arith.constant 0 : index
    %1 = vector.load %arg0[%c1, %c0_1] : memref<8x128xf32, #tpu.memory_space<vmem>>, vector<1x128xf32>
    %c2 = arith.constant 2 : index
    %c0_2 = arith.constant 0 : index
    %2 = vector.load %arg0[%c2, %c0_2] : memref<8x128xf32, #tpu.memory_space<vmem>>, vector<1x128xf32>
    %c3 = arith.constant 3 : index
    %c0_3 = arith.constant 0 : index
    %3 = vector.load %arg0[%c3, %c0_3] : memref<8x128xf32, #tpu.memory_space<vmem>>, vector<1x128xf32>
    %c4 = arith.constant 4 : index
    %c0_4 = arith.constant 0 : index
    %4 = vector.load %arg0[%c4, %c0_4] : memref<8x128xf32, #tpu.memory_space<vmem>>, vector<1x128xf32>
    %c5 = arith.constant 5 : index
    %c0_5 = arith.constant 0 : index
    %5 = vector.load %arg0[%c5, %c0_5] : memref<8x128xf32, #tpu.memory_space<vmem>>, vector<1x128xf32>
    %c0_6 = arith.constant 0 : index
    %c0_7 = arith.constant 0 : index
    %6 = vector.load %arg3[%c0_6, %c0_7] : memref<536x128xf32, #tpu.memory_space<vmem>>, vector<128x128xf32>
    %cst = arith.constant dense<0.000000e+00> : vector<1x128xf32>
    %7 = tpu.matmul %0, %6, %cst {dimension_numbers = #tpu.dot_dimension_numbers<[1], [0], [0], [1], [0, 0, 1, 1], [], []>} : vector<1x128xf32>, vector<128x128xf32>, vector<1x128xf32> -> vector<1x128xf32>
    %cst_8 = arith.constant 0.000000e+00 : f32
    %8 = vector.broadcast %cst_8 : f32 to vector<1x128xf32>
    %9 = arith.maximumf %7, %8 : vector<1x128xf32>
    %c128 = arith.constant 128 : index
    %c0_9 = arith.constant 0 : index
    %10 = vector.load %arg3[%c128, %c0_9] : memref<536x128xf32, #tpu.memory_space<vmem>>, vector<128x128xf32>
    %cst_10 = arith.constant dense<0.000000e+00> : vector<1x128xf32>
    %11 = tpu.matmul %9, %10, %cst_10 {dimension_numbers = #tpu.dot_dimension_numbers<[1], [0], [0], [1], [0, 0, 1, 1], [], []>} : vector<1x128xf32>, vector<128x128xf32>, vector<1x128xf32> -> vector<1x128xf32>
    %cst_11 = arith.constant 0.000000e+00 : f32
    %12 = vector.broadcast %cst_11 : f32 to vector<1x128xf32>
    %13 = arith.maximumf %11, %12 : vector<1x128xf32>
    %c256 = arith.constant 256 : index
    %c0_12 = arith.constant 0 : index
    %14 = vector.load %arg3[%c256, %c0_12] : memref<536x128xf32, #tpu.memory_space<vmem>>, vector<128x128xf32>
    %cst_13 = arith.constant dense<0.000000e+00> : vector<1x128xf32>
    %15 = tpu.matmul %5, %14, %cst_13 {dimension_numbers = #tpu.dot_dimension_numbers<[1], [0], [0], [1], [0, 0, 1, 1], [], []>} : vector<1x128xf32>, vector<128x128xf32>, vector<1x128xf32> -> vector<1x128xf32>
    %16 = vector.extract_strided_slice %15 {offsets = [0, 0], sizes = [1, 8], strides = [1, 1]} : vector<1x128xf32> to vector<1x8xf32>
    %c384 = arith.constant 384 : index
    %c0_14 = arith.constant 0 : index
    %17 = vector.load %arg3[%c384, %c0_14] : memref<536x128xf32, #tpu.memory_space<vmem>>, vector<8x128xf32>
    %cst_15 = arith.constant dense<0xFF800000> : vector<1xf32>
    %18 = vector.multi_reduction <maximumf>, %16, %cst_15 [1] : vector<1x8xf32> to vector<1xf32>
    %19 = vector.shape_cast %18 : vector<1xf32> to vector<1x1xf32>
    %20 = vector.broadcast %19 : vector<1x1xf32> to vector<1x8xf32>
    %21 = arith.subf %16, %20 : vector<1x8xf32>
    %22 = math.exp %21 : vector<1x8xf32>
    %cst_16 = arith.constant dense<0.000000e+00> : vector<1xf32>
    %23 = vector.multi_reduction <add>, %22, %cst_16 [1] : vector<1x8xf32> to vector<1xf32>
    %24 = vector.shape_cast %23 : vector<1xf32> to vector<1x1xf32>
    %25 = tpu.reciprocal %24 {approx = true} : vector<1x1xf32> -> vector<1x1xf32>
    %26 = vector.broadcast %25 : vector<1x1xf32> to vector<1x8xf32>
    %27 = arith.mulf %22, %26 : vector<1x8xf32>
    %cst_17 = arith.constant dense<0.000000e+00> : vector<1x128xf32>
    %28 = tpu.matmul %27, %17, %cst_17 {dimension_numbers = #tpu.dot_dimension_numbers<[1], [0], [0], [1], [0, 0, 1, 1], [], []>} : vector<1x8xf32>, vector<8x128xf32>, vector<1x128xf32> -> vector<1x128xf32>
    %29 = vector.extract_strided_slice %15 {offsets = [0, 8], sizes = [1, 8], strides = [1, 1]} : vector<1x128xf32> to vector<1x8xf32>
    %c392 = arith.constant 392 : index
    %c0_18 = arith.constant 0 : index
    %30 = vector.load %arg3[%c392, %c0_18] : memref<536x128xf32, #tpu.memory_space<vmem>>, vector<8x128xf32>
    %cst_19 = arith.constant dense<0xFF800000> : vector<1xf32>
    %31 = vector.multi_reduction <maximumf>, %29, %cst_19 [1] : vector<1x8xf32> to vector<1xf32>
    %32 = vector.shape_cast %31 : vector<1xf32> to vector<1x1xf32>
    %33 = vector.broadcast %32 : vector<1x1xf32> to vector<1x8xf32>
    %34 = arith.subf %29, %33 : vector<1x8xf32>
    %35 = math.exp %34 : vector<1x8xf32>
    %cst_20 = arith.constant dense<0.000000e+00> : vector<1xf32>
    %36 = vector.multi_reduction <add>, %35, %cst_20 [1] : vector<1x8xf32> to vector<1xf32>
    %37 = vector.shape_cast %36 : vector<1xf32> to vector<1x1xf32>
    %38 = tpu.reciprocal %37 {approx = true} : vector<1x1xf32> -> vector<1x1xf32>
    %39 = vector.broadcast %38 : vector<1x1xf32> to vector<1x8xf32>
    %40 = arith.mulf %35, %39 : vector<1x8xf32>
    %cst_21 = arith.constant dense<0.000000e+00> : vector<1x128xf32>
    %41 = tpu.matmul %40, %30, %cst_21 {dimension_numbers = #tpu.dot_dimension_numbers<[1], [0], [0], [1], [0, 0, 1, 1], [], []>} : vector<1x8xf32>, vector<8x128xf32>, vector<1x128xf32> -> vector<1x128xf32>
    %42 = tpu.concatenate %13, %1 in 1 : vector<1x128xf32>, vector<1x128xf32> -> vector<1x256xf32>
    %c0_22 = arith.constant 0 : index
    %c0_23 = arith.constant 0 : index
    %43 = vector.load %arg1[%c0_22, %c0_23] : memref<256x640xf32, #tpu.memory_space<vmem>>, vector<256x640xf32>
    %cst_24 = arith.constant dense<0.000000e+00> : vector<1x640xf32>
    %44 = tpu.matmul %42, %43, %cst_24 {dimension_numbers = #tpu.dot_dimension_numbers<[1], [0], [0], [1], [0, 0, 1, 1], [], []>} : vector<1x256xf32>, vector<256x640xf32>, vector<1x640xf32> -> vector<1x640xf32>
    %45 = vector.extract_strided_slice %44 {offsets = [0, 0], sizes = [1, 128], strides = [1, 1]} : vector<1x640xf32> to vector<1x128xf32>
    %46 = arith.negf %45 : vector<1x128xf32>
    %47 = math.exp %46 : vector<1x128xf32>
    %cst_25 = arith.constant 1.000000e+00 : f32
    %48 = vector.broadcast %cst_25 : f32 to vector<1x128xf32>
    %49 = arith.addf %48, %47 : vector<1x128xf32>
    %50 = arith.divf %48, %49 : vector<1x128xf32>
    %51 = vector.extract_strided_slice %44 {offsets = [0, 128], sizes = [1, 128], strides = [1, 1]} : vector<1x640xf32> to vector<1x128xf32>
    %52 = arith.negf %51 : vector<1x128xf32>
    %53 = math.exp %52 : vector<1x128xf32>
    %cst_26 = arith.constant 1.000000e+00 : f32
    %54 = vector.broadcast %cst_26 : f32 to vector<1x128xf32>
    %55 = arith.addf %54, %53 : vector<1x128xf32>
    %56 = arith.divf %54, %55 : vector<1x128xf32>
    %57 = vector.extract_strided_slice %44 {offsets = [0, 256], sizes = [1, 128], strides = [1, 1]} : vector<1x640xf32> to vector<1x128xf32>
    %58 = arith.negf %57 : vector<1x128xf32>
    %59 = math.exp %58 : vector<1x128xf32>
    %cst_27 = arith.constant 1.000000e+00 : f32
    %60 = vector.broadcast %cst_27 : f32 to vector<1x128xf32>
    %61 = arith.addf %60, %59 : vector<1x128xf32>
    %62 = arith.divf %60, %61 : vector<1x128xf32>
    %63 = vector.extract_strided_slice %44 {offsets = [0, 384], sizes = [1, 128], strides = [1, 1]} : vector<1x640xf32> to vector<1x128xf32>
    %64 = arith.negf %63 : vector<1x128xf32>
    %65 = math.exp %64 : vector<1x128xf32>
    %cst_28 = arith.constant 1.000000e+00 : f32
    %66 = vector.broadcast %cst_28 : f32 to vector<1x128xf32>
    %67 = arith.addf %66, %65 : vector<1x128xf32>
    %68 = arith.divf %66, %67 : vector<1x128xf32>
    %69 = vector.extract_strided_slice %44 {offsets = [0, 512], sizes = [1, 128], strides = [1, 1]} : vector<1x640xf32> to vector<1x128xf32>
    %70 = math.tanh %69 : vector<1x128xf32>
    %71 = arith.mulf %56, %2 : vector<1x128xf32>
    %72 = arith.mulf %50, %70 : vector<1x128xf32>
    %73 = arith.addf %71, %72 : vector<1x128xf32>
    %74 = arith.mulf %68, %28 : vector<1x128xf32>
    %75 = arith.addf %73, %74 : vector<1x128xf32>
    %76 = math.tanh %75 : vector<1x128xf32>
    %77 = arith.mulf %62, %76 : vector<1x128xf32>
    %78 = tpu.concatenate %77, %13, %3 in 1 : vector<1x128xf32>, vector<1x128xf32>, vector<1x128xf32> -> vector<1x384xf32>
    %c0_29 = arith.constant 0 : index
    %c0_30 = arith.constant 0 : index
    %79 = vector.load %arg2[%c0_29, %c0_30] : memref<384x640xf32, #tpu.memory_space<vmem>>, vector<384x640xf32>
    %cst_31 = arith.constant dense<0.000000e+00> : vector<1x640xf32>
    %80 = tpu.matmul %78, %79, %cst_31 {dimension_numbers = #tpu.dot_dimension_numbers<[1], [0], [0], [1], [0, 0, 1, 1], [], []>} : vector<1x384xf32>, vector<384x640xf32>, vector<1x640xf32> -> vector<1x640xf32>
    %81 = vector.extract_strided_slice %80 {offsets = [0, 0], sizes = [1, 128], strides = [1, 1]} : vector<1x640xf32> to vector<1x128xf32>
    %82 = arith.negf %81 : vector<1x128xf32>
    %83 = math.exp %82 : vector<1x128xf32>
    %cst_32 = arith.constant 1.000000e+00 : f32
    %84 = vector.broadcast %cst_32 : f32 to vector<1x128xf32>
    %85 = arith.addf %84, %83 : vector<1x128xf32>
    %86 = arith.divf %84, %85 : vector<1x128xf32>
    %87 = vector.extract_strided_slice %80 {offsets = [0, 128], sizes = [1, 128], strides = [1, 1]} : vector<1x640xf32> to vector<1x128xf32>
    %88 = arith.negf %87 : vector<1x128xf32>
    %89 = math.exp %88 : vector<1x128xf32>
    %cst_33 = arith.constant 1.000000e+00 : f32
    %90 = vector.broadcast %cst_33 : f32 to vector<1x128xf32>
    %91 = arith.addf %90, %89 : vector<1x128xf32>
    %92 = arith.divf %90, %91 : vector<1x128xf32>
    %93 = vector.extract_strided_slice %80 {offsets = [0, 256], sizes = [1, 128], strides = [1, 1]} : vector<1x640xf32> to vector<1x128xf32>
    %94 = arith.negf %93 : vector<1x128xf32>
    %95 = math.exp %94 : vector<1x128xf32>
    %cst_34 = arith.constant 1.000000e+00 : f32
    %96 = vector.broadcast %cst_34 : f32 to vector<1x128xf32>
    %97 = arith.addf %96, %95 : vector<1x128xf32>
    %98 = arith.divf %96, %97 : vector<1x128xf32>
    %99 = vector.extract_strided_slice %80 {offsets = [0, 384], sizes = [1, 128], strides = [1, 1]} : vector<1x640xf32> to vector<1x128xf32>
    %100 = arith.negf %99 : vector<1x128xf32>
    %101 = math.exp %100 : vector<1x128xf32>
    %cst_35 = arith.constant 1.000000e+00 : f32
    %102 = vector.broadcast %cst_35 : f32 to vector<1x128xf32>
    %103 = arith.addf %102, %101 : vector<1x128xf32>
    %104 = arith.divf %102, %103 : vector<1x128xf32>
    %105 = vector.extract_strided_slice %80 {offsets = [0, 512], sizes = [1, 128], strides = [1, 1]} : vector<1x640xf32> to vector<1x128xf32>
    %106 = math.tanh %105 : vector<1x128xf32>
    %107 = arith.mulf %92, %4 : vector<1x128xf32>
    %108 = arith.mulf %86, %106 : vector<1x128xf32>
    %109 = arith.addf %107, %108 : vector<1x128xf32>
    %110 = arith.mulf %104, %41 : vector<1x128xf32>
    %111 = arith.addf %109, %110 : vector<1x128xf32>
    %112 = math.tanh %111 : vector<1x128xf32>
    %113 = arith.mulf %98, %112 : vector<1x128xf32>
    %c400 = arith.constant 400 : index
    %c0_36 = arith.constant 0 : index
    %114 = vector.load %arg3[%c400, %c0_36] : memref<536x128xf32, #tpu.memory_space<vmem>>, vector<128x128xf32>
    %cst_37 = arith.constant dense<0.000000e+00> : vector<1x128xf32>
    %115 = tpu.matmul %113, %114, %cst_37 {dimension_numbers = #tpu.dot_dimension_numbers<[1], [0], [0], [1], [0, 0, 1, 1], [], []>} : vector<1x128xf32>, vector<128x128xf32>, vector<1x128xf32> -> vector<1x128xf32>
    %c528 = arith.constant 528 : index
    %c0_38 = arith.constant 0 : index
    %116 = vector.load %arg3[%c528, %c0_38] : memref<536x128xf32, #tpu.memory_space<vmem>>, vector<1x128xf32>
    %117 = arith.addf %115, %116 : vector<1x128xf32>
    %c0_39 = arith.constant 0 : index
    %c0_40 = arith.constant 0 : index
    %118 = vector.load %arg4[%c0_39, %c0_40] : memref<8x128xf32, #tpu.memory_space<vmem>>, vector<1x128xf32>
    tpu.vector_store %arg4[%c0_39, %c0_40], %117 {strides = array<i32>} : memref<8x128xf32, #tpu.memory_space<vmem>>, vector<1x128xf32>,
    %c1_41 = arith.constant 1 : index
    %c0_42 = arith.constant 0 : index
    %119 = vector.load %arg4[%c1_41, %c0_42] : memref<8x128xf32, #tpu.memory_space<vmem>>, vector<1x128xf32>
    tpu.vector_store %arg4[%c1_41, %c0_42], %77 {strides = array<i32>} : memref<8x128xf32, #tpu.memory_space<vmem>>, vector<1x128xf32>,
    %c2_43 = arith.constant 2 : index
    %c0_44 = arith.constant 0 : index
    %120 = vector.load %arg4[%c2_43, %c0_44] : memref<8x128xf32, #tpu.memory_space<vmem>>, vector<1x128xf32>
    tpu.vector_store %arg4[%c2_43, %c0_44], %75 {strides = array<i32>} : memref<8x128xf32, #tpu.memory_space<vmem>>, vector<1x128xf32>,
    %c3_45 = arith.constant 3 : index
    %c0_46 = arith.constant 0 : index
    %121 = vector.load %arg4[%c3_45, %c0_46] : memref<8x128xf32, #tpu.memory_space<vmem>>, vector<1x128xf32>
    tpu.vector_store %arg4[%c3_45, %c0_46], %113 {strides = array<i32>} : memref<8x128xf32, #tpu.memory_space<vmem>>, vector<1x128xf32>,
    %c4_47 = arith.constant 4 : index
    %c0_48 = arith.constant 0 : index
    %122 = vector.load %arg4[%c4_47, %c0_48] : memref<8x128xf32, #tpu.memory_space<vmem>>, vector<1x128xf32>
    tpu.vector_store %arg4[%c4_47, %c0_48], %111 {strides = array<i32>} : memref<8x128xf32, #tpu.memory_space<vmem>>, vector<1x128xf32>,
    %cst_49 = arith.constant 0.000000e+00 : f32
    %123 = vector.broadcast %cst_49 : f32 to vector<3x128xf32>
    %c5_50 = arith.constant 5 : index
    %c0_51 = arith.constant 0 : index
    %124 = vector.load %arg4[%c5_50, %c0_51] : memref<8x128xf32, #tpu.memory_space<vmem>>, vector<3x128xf32>
    tpu.vector_store %arg4[%c5_50, %c0_51], %123 {strides = array<i32>} : memref<8x128xf32, #tpu.memory_space<vmem>>, vector<3x128xf32>,
    return
  }
}

</mosaic_0001>

<llo_original>
// kernel: a3c_dnd_forward.1
$region0: #{a3c_dnd_forward.1}
  #allocation0 [shape = 'u32[]', space=smem, size = 0x4, offset = 0x4, fixed_abs, tag = 'smem constant byte address 0x4 - core index']
  #allocation1 [shape = 'u32[144,128]{1,0:T(1,128)}', space=vmem, size = 0x12000, scoped, tag = 'internal scratch']
  %s0 = inlined_call_operand.vmem [shape: f32[8,128], index: 0, kind: input, shape index: {}]
  %s1 = inlined_call_operand.hbm [shape: f32[256,640], index: 1, kind: input, shape index: {}]
  %s2 = inlined_call_operand.hbm [shape: f32[384,640], index: 2, kind: input, shape index: {}]
  %s3 = inlined_call_operand.hbm [shape: f32[536,128], index: 3, kind: input, shape index: {}]
  %s4 = inlined_call_operand.vmem [shape: f32[8,128], index: 4, kind: output, shape index: {}]
  %s5 = sld [smem:[#allocation0]]
  $region38: #{a3c_dnd_forward.1} parent=0
    _
  %s7 = ssub.s32 1, %s5
  %s8 = scalar_select 0, %s7, %s5
  $region1: #{a3c_dnd_forward.1} parent=0
    #allocation2 [shape = 'u8[655360]{0}', space=vmem, size = 0xa0000, scoped, tag = 'input window, operand 1, single buffered']
    #allocation3 [shape = 's32[1]{0}', space=sflag, size = 0x4, scoped, tag = 'scoped memory for a3c_dnd_forward.1']
    #allocation4 [shape = 'u8[983040]{0}', space=vmem, size = 0xf0000, scoped, tag = 'input window, operand 2, single buffered']
    #allocation5 [shape = 's32[1]{0}', space=sflag, size = 0x4, scoped, tag = 'scoped memory for a3c_dnd_forward.1']
    #allocation6 [shape = 'u8[274432]{0}', space=vmem, size = 0x43000, scoped, tag = 'input window, operand 3, single buffered']
    %9 = vsyncpa [#allocation3], 0
    %10 = vsyncpa [#allocation5], 0
    // Predicated region
    $region2: #{a3c_dnd_forward.1} parent=1 // pred_check
      _
    $region3: #{a3c_dnd_forward.1} parent=1 // pred_check_branch
      %12 = sbr.rel (0) target = $region5
    $region4: #{a3c_dnd_forward.1} parent=1 // pred_region
      _
    $region5: #{a3c_dnd_forward.1} parent=1 // pred_fallthru
      _
    // Predicated region
    $region6: #{a3c_dnd_forward.1} parent=1 // pred_check
      _
    $region7: #{a3c_dnd_forward.1} parent=1 // pred_check_branch
      %14 = sbr.rel (0) target = $region9
    $region8: #{a3c_dnd_forward.1} parent=1 // pred_region
      %s16 = ssub.s32 20480, 20480
      %17 = vsyncadd [#allocation3], %s16
      %s18 = sshll.u32 [#allocation2], 4
      %s19 = int_to_ptr.vmem [resolvable:$true] %s18
      %24 = dma.hbm_to_vmem [thread:$0]  %s1, 20480, %s19, [#allocation3], 640, 640, 40
    $region9: #{a3c_dnd_forward.1} parent=1 // pred_fallthru
      _
    // Predicated region
    $region10: #{a3c_dnd_forward.1} parent=1 // pred_check
      _
    $region11: #{a3c_dnd_forward.1} parent=1 // pred_check_branch
      %26 = sbr.rel (0) target = $region13
    $region12: #{a3c_dnd_forward.1} parent=1 // pred_region
      %s28 = ssub.s32 30720, 30720
      %29 = vsyncadd [#allocation5], %s28
      %s30 = sshll.u32 [#allocation4], 4
      %s31 = int_to_ptr.vmem [resolvable:$true] %s30
      %36 = dma.hbm_to_vmem [thread:$0]  %s2, 30720, %s31, [#allocation5], 640, 640, 40
    $region13: #{a3c_dnd_forward.1} parent=1 // pred_fallthru
      _
    // Predicated region
    $region14: #{a3c_dnd_forward.1} parent=1 // pred_check
      _
    $region15: #{a3c_dnd_forward.1} parent=1 // pred_check_branch
      %38 = sbr.rel (0) target = $region17
    $region16: #{a3c_dnd_forward.1} parent=1 // pred_region
      %s40 = ssub.s32 8576, 8576
      %41 = vsyncadd [#allocation5], %s40
      %s42 = sshll.u32 [#allocation6], 4
      %s43 = int_to_ptr.vmem [resolvable:$true] %s42
      %48 = dma.hbm_to_vmem [thread:$0]  %s3, 8576, %s43, [#allocation5], 128, 128, 8
    $region17: #{a3c_dnd_forward.1} parent=1 // pred_fallthru
      _
    // Predicated region
    $region18: #{a3c_dnd_forward.1} parent=1 // pred_check
      _
    $region19: #{a3c_dnd_forward.1} parent=1 // pred_check_branch
      %50 = sbr.rel (0) target = $region21
    $region20: #{a3c_dnd_forward.1} parent=1 // pred_region
      %51 = dma.done [#allocation3], 20480
    $region21: #{a3c_dnd_forward.1} parent=1 // pred_fallthru
      _
    // Predicated region
    $region22: #{a3c_dnd_forward.1} parent=1 // pred_check
      _
    $region23: #{a3c_dnd_forward.1} parent=1 // pred_check_branch
      %53 = sbr.rel (0) target = $region25
    $region24: #{a3c_dnd_forward.1} parent=1 // pred_region
      %54 = dma.done [#allocation5], 30720
    $region25: #{a3c_dnd_forward.1} parent=1 // pred_fallthru
      _
    // Predicated region
    $region26: #{a3c_dnd_forward.1} parent=1 // pred_check
      _
    $region27: #{a3c_dnd_forward.1} parent=1 // pred_check_branch
      %56 = sbr.rel (0) target = $region29
    $region28: #{a3c_dnd_forward.1} parent=1 // pred_region
      %57 = dma.done [#allocation5], 8576
    $region29: #{a3c_dnd_forward.1} parent=1 // pred_fallthru
      _
    %v58 = vld [vmem:[%s0] sm:$0x1]
    %v59 = vld [vmem:[%s0 + $0x1] sm:$0x1]
    %v60 = vld [vmem:[%s0 + $0x2] sm:$0x1]
    %v61 = vld [vmem:[%s0 + $0x3] sm:$0x1]
    %v62 = vld [vmem:[%s0 + $0x4] sm:$0x1]
    %v63 = vld [vmem:[%s0 + $0x5] sm:$0x1]
    %v64 = vld [vmem:[#allocation6] sm:$0xff]
    %v65 = vld [vmem:[#allocation6 + $0x8] sm:$0xff]
    %v66 = vld [vmem:[#allocation6 + $0x10] sm:$0xff]
    %v67 = vld [vmem:[#allocation6 + $0x18] sm:$0xff]
    %v68 = vld [vmem:[#allocation6 + $0x20] sm:$0xff]
    %v69 = vld [vmem:[#allocation6 + $0x28] sm:$0xff]
    %v70 = vld [vmem:[#allocation6 + $0x30] sm:$0xff]
    %v71 = vld [vmem:[#allocation6 + $0x38] sm:$0xff]
    %v72 = vld [vmem:[#allocation6 + $0x40] sm:$0xff]
    %v73 = vld [vmem:[#allocation6 + $0x48] sm:$0xff]
    %v74 = vld [vmem:[#allocation6 + $0x50] sm:$0xff]
    %v75 = vld [vmem:[#allocation6 + $0x58] sm:$0xff]
    %v76 = vld [vmem:[#allocation6 + $0x60] sm:$0xff]
    %v77 = vld [vmem:[#allocation6 + $0x68] sm:$0xff]
    %v78 = vld [vmem:[#allocation6 + $0x70] sm:$0xff]
    %v79 = vld [vmem:[#allocation6 + $0x78] sm:$0xff]
    %80 = vmatprep.subr.mxu0 0.0
    %81 = vmatpush1.msra.mxu0 %v64
    %82 = vmatprep.subr.mxu0 0.0
    %83 = vmatpush1.msra.mxu0 %v65
    %84 = vmatprep.subr.mxu0 0.0
    %85 = vmatpush1.msra.mxu0 %v66
    %86 = vmatprep.subr.mxu0 0.0
    %87 = vmatpush1.msra.mxu0 %v67
    %88 = vmatprep.subr.mxu0 0.0
    %89 = vmatpush1.msra.mxu0 %v68
    %90 = vmatprep.subr.mxu0 0.0
    %91 = vmatpush1.msra.mxu0 %v69
    %92 = vmatprep.subr.mxu0 0.0
    %93 = vmatpush1.msra.mxu0 %v70
    %94 = vmatprep.subr.mxu0 0.0
    %95 = vmatpush1.msra.mxu0 %v71
    %96 = vmatprep.subr.mxu0 0.0
    %97 = vmatpush1.msra.mxu0 %v72
    %98 = vmatprep.subr.mxu0 0.0
    %99 = vmatpush1.msra.mxu0 %v73
    %100 = vmatprep.subr.mxu0 0.0
    %101 = vmatpush1.msra.mxu0 %v74
    %102 = vmatprep.subr.mxu0 0.0
    %103 = vmatpush1.msra.mxu0 %v75
    %104 = vmatprep.subr.mxu0 0.0
    %105 = vmatpush1.msra.mxu0 %v76
    %106 = vmatprep.subr.mxu0 0.0
    %107 = vmatpush1.msra.mxu0 %v77
    %108 = vmatprep.subr.mxu0 0.0
    %109 = vmatpush1.msra.mxu0 %v78
    %110 = vmatprep.subr.mxu0 0.0
    %111 = vmatpush1.msra.mxu0 %v79
    %112 = vmatprep.subr.mxu0 0.0
    %113 = vmatpush1.msra.mxu0 0.0
    %114 = vmatprep.subr.mxu0 0.0
    %115 = vmatpush1.msra.mxu0 0.0
    %116 = vmatprep.subr.mxu0 0.0
    %117 = vmatpush1.msra.mxu0 0.0
    %118 = vmatprep.subr.mxu0 0.0
    %119 = vmatpush1.msra.mxu0 0.0
    %120 = vmatprep.subr.mxu0 0.0
    %121 = vmatpush1.msra.mxu0 0.0
    %122 = vmatprep.subr.mxu0 0.0
    %123 = vmatpush1.msra.mxu0 0.0
    %124 = vmatprep.subr.mxu0 0.0
    %125 = vmatpush1.msra.mxu0 0.0
    %126 = vmatprep.subr.mxu0 0.0
    %127 = vmatpush1.msra.mxu0 0.0
    %128 = vmatprep.subr.mxu0 0.0
    %129 = vmatpush1.msra.mxu0 0.0
    %130 = vmatprep.subr.mxu0 0.0
    %131 = vmatpush1.msra.mxu0 0.0
    %132 = vmatprep.subr.mxu0 0.0
    %133 = vmatpush1.msra.mxu0 0.0
    %134 = vmatprep.subr.mxu0 0.0
    %135 = vmatpush1.msra.mxu0 0.0
    %136 = vmatprep.subr.mxu0 0.0
    %137 = vmatpush1.msra.mxu0 0.0
    %138 = vmatprep.subr.mxu0 0.0
    %139 = vmatpush1.msra.mxu0 0.0
    %140 = vmatprep.subr.mxu0 0.0
    %141 = vmatpush1.msra.mxu0 0.0
    %142 = vmatprep.subr.mxu0 0.0
    %143 = vmatpush1.msra.mxu0 0.0
    %144 = vmatprep.mubr.f32.mxu0 0.0
    %145 = vmatmul.mubr.f32.gmra.mrb[0].mxu0 %v58
    %v146 = vpop.f32.mrb[0].mxu0
    %v147 = vadd.f32 0.0, %v146
    %v148 = vpop.f32.mrb[0].mxu0
    %149 = vdwg.mxu0
    %v150 = vmax.f32 %v147, 0.0
    %v151 = vld [vmem:[#allocation6 + $0x80] sm:$0xff]
    %v152 = vld [vmem:[#allocation6 + $0x88] sm:$0xff]
    %v153 = vld [vmem:[#allocation6 + $0x90] sm:$0xff]
    %v154 = vld [vmem:[#allocation6 + $0x98] sm:$0xff]
    %v155 = vld [vmem:[#allocation6 + $0xa0] sm:$0xff]
    %v156 = vld [vmem:[#allocation6 + $0xa8] sm:$0xff]
    %v157 = vld [vmem:[#allocation6 + $0xb0] sm:$0xff]
    %v158 = vld [vmem:[#allocation6 + $0xb8] sm:$0xff]
    %v159 = vld [vmem:[#allocation6 + $0xc0] sm:$0xff]
    %v160 = vld [vmem:[#allocation6 + $0xc8] sm:$0xff]
    %v161 = vld [vmem:[#allocation6 + $0xd0] sm:$0xff]
    %v162 = vld [vmem:[#allocation6 + $0xd8] sm:$0xff]
    %v163 = vld [vmem:[#allocation6 + $0xe0] sm:$0xff]
    %v164 = vld [vmem:[#allocation6 + $0xe8] sm:$0xff]
    %v165 = vld [vmem:[#allocation6 + $0xf0] sm:$0xff]
    %v166 = vld [vmem:[#allocation6 + $0xf8] sm:$0xff]
    %167 = vmatprep.subr.mxu0 0.0
    %168 = vmatpush1.msra.mxu0 %v151
    %169 = vmatprep.subr.mxu0 0.0
    %170 = vmatpush1.msra.mxu0 %v152
    %171 = vmatprep.subr.mxu0 0.0
    %172 = vmatpush1.msra.mxu0 %v153
    %173 = vmatprep.subr.mxu0 0.0
    %174 = vmatpush1.msra.mxu0 %v154
    %175 = vmatprep.subr.mxu0 0.0
    %176 = vmatpush1.msra.mxu0 %v155
    %177 = vmatprep.subr.mxu0 0.0
    %178 = vmatpush1.msra.mxu0 %v156
    %179 = vmatprep.subr.mxu0 0.0
    %180 = vmatpush1.msra.mxu0 %v157
    %181 = vmatprep.subr.mxu0 0.0
    %182 = vmatpush1.msra.mxu0 %v158
    %183 = vmatprep.subr.mxu0 0.0
    %184 = vmatpush1.msra.mxu0 %v159
    %185 = vmatprep.subr.mxu0 0.0
    %186 = vmatpush1.msra.mxu0 %v160
    %187 = vmatprep.subr.mxu0 0.0
    %188 = vmatpush1.msra.mxu0 %v161
    %189 = vmatprep.subr.mxu0 0.0
    %190 = vmatpush1.msra.mxu0 %v162
    %191 = vmatprep.subr.mxu0 0.0
    %192 = vmatpush1.msra.mxu0 %v163
    %193 = vmatprep.subr.mxu0 0.0
    %194 = vmatpush1.msra.mxu0 %v164
    %195 = vmatprep.subr.mxu0 0.0
    %196 = vmatpush1.msra.mxu0 %v165
    %197 = vmatprep.subr.mxu0 0.0
    %198 = vmatpush1.msra.mxu0 %v166
    %199 = vmatprep.subr.mxu0 0.0
    %200 = vmatpush1.msra.mxu0 0.0
    %201 = vmatprep.subr.mxu0 0.0
    %202 = vmatpush1.msra.mxu0 0.0
    %203 = vmatprep.subr.mxu0 0.0
    %204 = vmatpush1.msra.mxu0 0.0
    %205 = vmatprep.subr.mxu0 0.0
    %206 = vmatpush1.msra.mxu0 0.0
    %207 = vmatprep.subr.mxu0 0.0
    %208 = vmatpush1.msra.mxu0 0.0
    %209 = vmatprep.subr.mxu0 0.0
    %210 = vmatpush1.msra.mxu0 0.0
    %211 = vmatprep.subr.mxu0 0.0
    %212 = vmatpush1.msra.mxu0 0.0
    %213 = vmatprep.subr.mxu0 0.0
    %214 = vmatpush1.msra.mxu0 0.0
    %215 = vmatprep.subr.mxu0 0.0
    %216 = vmatpush1.msra.mxu0 0.0
    %217 = vmatprep.subr.mxu0 0.0
    %218 = vmatpush1.msra.mxu0 0.0
    %219 = vmatprep.subr.mxu0 0.0
    %220 = vmatpush1.msra.mxu0 0.0
    %221 = vmatprep.subr.mxu0 0.0
    %222 = vmatpush1.msra.mxu0 0.0
    %223 = vmatprep.subr.mxu0 0.0
    %224 = vmatpush1.msra.mxu0 0.0
    %225 = vmatprep.subr.mxu0 0.0
    %226 = vmatpush1.msra.mxu0 0.0
    %227 = vmatprep.subr.mxu0 0.0
    %228 = vmatpush1.msra.mxu0 0.0
    %229 = vmatprep.subr.mxu0 0.0
    %230 = vmatpush1.msra.mxu0 0.0
    %231 = vmatprep.mubr.f32.mxu0 0.0
    %232 = vmatmul.mubr.f32.gmra.mrb[0].mxu0 %v150
    %v233 = vpop.f32.mrb[0].mxu0
    %v234 = vadd.f32 0.0, %v233
    %v235 = vpop.f32.mrb[0].mxu0
    %236 = vdwg.mxu0
    %v237 = vmax.f32 %v234, 0.0
    %v238 = vld [vmem:[#allocation6 + $0x100] sm:$0xff]
    %v239 = vld [vmem:[#allocation6 + $0x108] sm:$0xff]
    %v240 = vld [vmem:[#allocation6 + $0x110] sm:$0xff]
    %v241 = vld [vmem:[#allocation6 + $0x118] sm:$0xff]
    %v242 = vld [vmem:[#allocation6 + $0x120] sm:$0xff]
    %v243 = vld [vmem:[#allocation6 + $0x128] sm:$0xff]
    %v244 = vld [vmem:[#allocation6 + $0x130] sm:$0xff]
    %v245 = vld [vmem:[#allocation6 + $0x138] sm:$0xff]
    %v246 = vld [vmem:[#allocation6 + $0x140] sm:$0xff]
    %v247 = vld [vmem:[#allocation6 + $0x148] sm:$0xff]
    %v248 = vld [vmem:[#allocation6 + $0x150] sm:$0xff]
    %v249 = vld [vmem:[#allocation6 + $0x158] sm:$0xff]
    %v250 = vld [vmem:[#allocation6 + $0x160] sm:$0xff]
    %v251 = vld [vmem:[#allocation6 + $0x168] sm:$0xff]
    %v252 = vld [vmem:[#allocation6 + $0x170] sm:$0xff]
    %v253 = vld [vmem:[#allocation6 + $0x178] sm:$0xff]
    %254 = vmatprep.subr.mxu0 0.0
    %255 = vmatpush1.msra.mxu0 %v238
    %256 = vmatprep.subr.mxu0 0.0
    %257 = vmatpush1.msra.mxu0 %v239
    %258 = vmatprep.subr.mxu0 0.0
    %259 = vmatpush1.msra.mxu0 %v240
    %260 = vmatprep.subr.mxu0 0.0
    %261 = vmatpush1.msra.mxu0 %v241
    %262 = vmatprep.subr.mxu0 0.0
    %263 = vmatpush1.msra.mxu0 %v242
    %264 = vmatprep.subr.mxu0 0.0
    %265 = vmatpush1.msra.mxu0 %v243
    %266 = vmatprep.subr.mxu0 0.0
    %267 = vmatpush1.msra.mxu0 %v244
    %268 = vmatprep.subr.mxu0 0.0
    %269 = vmatpush1.msra.mxu0 %v245
    %270 = vmatprep.subr.mxu0 0.0
    %271 = vmatpush1.msra.mxu0 %v246
    %272 = vmatprep.subr.mxu0 0.0
    %273 = vmatpush1.msra.mxu0 %v247
    %274 = vmatprep.subr.mxu0 0.0
    %275 = vmatpush1.msra.mxu0 %v248
    %276 = vmatprep.subr.mxu0 0.0
    %277 = vmatpush1.msra.mxu0 %v249
    %278 = vmatprep.subr.mxu0 0.0
    %279 = vmatpush1.msra.mxu0 %v250
    %280 = vmatprep.subr.mxu0 0.0
    %281 = vmatpush1.msra.mxu0 %v251
    %282 = vmatprep.subr.mxu0 0.0
    %283 = vmatpush1.msra.mxu0 %v252
    %284 = vmatprep.subr.mxu0 0.0
    %285 = vmatpush1.msra.mxu0 %v253
    %286 = vmatprep.subr.mxu0 0.0
    %287 = vmatpush1.msra.mxu0 0.0
    %288 = vmatprep.subr.mxu0 0.0
    %289 = vmatpush1.msra.mxu0 0.0
    %290 = vmatprep.subr.mxu0 0.0
    %291 = vmatpush1.msra.mxu0 0.0
    %292 = vmatprep.subr.mxu0 0.0
    %293 = vmatpush1.msra.mxu0 0.0
    %294 = vmatprep.subr.mxu0 0.0
    %295 = vmatpush1.msra.mxu0 0.0
    %296 = vmatprep.subr.mxu0 0.0
    %297 = vmatpush1.msra.mxu0 0.0
    %298 = vmatprep.subr.mxu0 0.0
    %299 = vmatpush1.msra.mxu0 0.0
    %300 = vmatprep.subr.mxu0 0.0
    %301 = vmatpush1.msra.mxu0 0.0
    %302 = vmatprep.subr.mxu0 0.0
    %303 = vmatpush1.msra.mxu0 0.0
    %304 = vmatprep.subr.mxu0 0.0
    %305 = vmatpush1.msra.mxu0 0.0
    %306 = vmatprep.subr.mxu0 0.0
    %307 = vmatpush1.msra.mxu0 0.0
    %308 = vmatprep.subr.mxu0 0.0
    %309 = vmatpush1.msra.mxu0 0.0
    %310 = vmatprep.subr.mxu0 0.0
    %311 = vmatpush1.msra.mxu0 0.0
    %312 = vmatprep.subr.mxu0 0.0
    %313 = vmatpush1.msra.mxu0 0.0
    %314 = vmatprep.subr.mxu0 0.0
    %315 = vmatpush1.msra.mxu0 0.0
    %316 = vmatprep.subr.mxu0 0.0
    %317 = vmatpush1.msra.mxu0 0.0
    %318 = vmatprep.mubr.f32.mxu0 0.0
    %319 = vmatmul.mubr.f32.gmra.mrb[0].mxu0 %v63
    %v320 = vpop.f32.mrb[0].mxu0
    %v321 = vadd.f32 0.0, %v320
    %v322 = vpop.f32.mrb[0].mxu0
    %323 = vdwg.mxu0
    %v324 = vld [vmem:[#allocation6 + $0x180] sm:$0xff]
    %vm325 = vcmask 57344
    %v326 = vsel %vm325, %v321, -inf
    %327 = vmax.xlane.f32.xlu0 %v326
    %v328 = vpop.xlane.xlu0 %327
    %v329 = vsub.f32 %v321, %v328
    %v330 = vmul.f32 %v329, 1.442695
    %v331 = vpow.pop %v330
    %v332 = vsel %vm325, %v331, 0.0
    %333 = vadd.xlane.f32.xlu0 %v332
    %v334 = vpop.xlane.xlu0 %333
    %v335 = vrcp.pop %v334
    %v336 = vmul.f32 %v331, %v335
    %vm337 = vcmask 64512
    %v339 = vsel %vm337, %v336, 0
    %341 = vmatprep.subr.mxu0 0.0
    %342 = vmatpush1.msra.mxu0 %v324
    %343 = vmatprep.subr.mxu0 0.0
    %344 = vmatpush1.msra.mxu0 0.0
    %345 = vmatprep.subr.mxu0 0.0
    %346 = vmatpush1.msra.mxu0 0.0
    %347 = vmatprep.subr.mxu0 0.0
    %348 = vmatpush1.msra.mxu0 0.0
    %349 = vmatprep.subr.mxu0 0.0
    %350 = vmatpush1.msra.mxu0 0.0
    %351 = vmatprep.subr.mxu0 0.0
    %352 = vmatpush1.msra.mxu0 0.0
    %353 = vmatprep.subr.mxu0 0.0
    %354 = vmatpush1.msra.mxu0 0.0
    %355 = vmatprep.subr.mxu0 0.0
    %356 = vmatpush1.msra.mxu0 0.0
    %357 = vmatprep.subr.mxu0 0.0
    %358 = vmatpush1.msra.mxu0 0.0
    %359 = vmatprep.subr.mxu0 0.0
    %360 = vmatpush1.msra.mxu0 0.0
    %361 = vmatprep.subr.mxu0 0.0
    %362 = vmatpush1.msra.mxu0 0.0
    %363 = vmatprep.subr.mxu0 0.0
    %364 = vmatpush1.msra.mxu0 0.0
    %365 = vmatprep.subr.mxu0 0.0
    %366 = vmatpush1.msra.mxu0 0.0
    %367 = vmatprep.subr.mxu0 0.0
    %368 = vmatpush1.msra.mxu0 0.0
    %369 = vmatprep.subr.mxu0 0.0
    %370 = vmatpush1.msra.mxu0 0.0
    %371 = vmatprep.subr.mxu0 0.0
    %372 = vmatpush1.msra.mxu0 0.0
    %373 = vmatprep.subr.mxu0 0.0
    %374 = vmatpush1.msra.mxu0 0.0
    %375 = vmatprep.subr.mxu0 0.0
    %376 = vmatpush1.msra.mxu0 0.0
    %377 = vmatprep.subr.mxu0 0.0
    %378 = vmatpush1.msra.mxu0 0.0
    %379 = vmatprep.subr.mxu0 0.0
    %380 = vmatpush1.msra.mxu0 0.0
    %381 = vmatprep.subr.mxu0 0.0
    %382 = vmatpush1.msra.mxu0 0.0
    %383 = vmatprep.subr.mxu0 0.0
    %384 = vmatpush1.msra.mxu0 0.0
    %385 = vmatprep.subr.mxu0 0.0
    %386 = vmatpush1.msra.mxu0 0.0
    %387 = vmatprep.subr.mxu0 0.0
    %388 = vmatpush1.msra.mxu0 0.0
    %389 = vmatprep.subr.mxu0 0.0
    %390 = vmatpush1.msra.mxu0 0.0
    %391 = vmatprep.subr.mxu0 0.0
    %392 = vmatpush1.msra.mxu0 0.0
    %393 = vmatprep.subr.mxu0 0.0
    %394 = vmatpush1.msra.mxu0 0.0
    %395 = vmatprep.subr.mxu0 0.0
    %396 = vmatpush1.msra.mxu0 0.0
    %397 = vmatprep.subr.mxu0 0.0
    %398 = vmatpush1.msra.mxu0 0.0
    %399 = vmatprep.subr.mxu0 0.0
    %400 = vmatpush1.msra.mxu0 0.0
    %401 = vmatprep.subr.mxu0 0.0
    %402 = vmatpush1.msra.mxu0 0.0
    %403 = vmatprep.subr.mxu0 0.0
    %404 = vmatpush1.msra.mxu0 0.0
    %405 = vmatprep.mubr.f32.mxu0 0.0
    %406 = vmatmul.mubr.f32.gmra.mrb[0].mxu0 %v339
    %v407 = vpop.f32.mrb[0].mxu0
    %v408 = vadd.f32 0.0, %v407
    %v409 = vpop.f32.mrb[0].mxu0
    %410 = vdwg.mxu0
    %v411 = vld [vmem:[#allocation6 + $0x188] sm:$0xff]
    %vm412 = vcmask 122944
    %v413 = vsel %vm412, %v321, -inf
    %414 = vmax.xlane.f32.xlu0 %v413
    %v415 = vpop.xlane.xlu0 %414
    %v416 = vsub.f32 %v321, %v415
    %v417 = vmul.f32 %v416, 1.442695
    %v418 = vpow.pop %v417
    %420 = vrot.lane.b32.xlu0 %v418, 120
    %v421 = vpop.permute.xlu0 %420
    %v423 = vsel %vm325, %v421, 0.0
    %424 = vadd.xlane.f32.xlu0 %v423
    %v425 = vpop.xlane.xlu0 %424
    %v426 = vrcp.pop %v425
    %v427 = vmul.f32 %v418, %v426
    %429 = vrot.lane.b32.xlu0 %v427, 120
    %v430 = vpop.permute.xlu0 %429
    %v431 = vsel %vm337, %v430, 0
    %433 = vmatprep.subr.mxu0 0.0
    %434 = vmatpush1.msra.mxu0 %v411
    %435 = vmatprep.subr.mxu0 0.0
    %436 = vmatpush1.msra.mxu0 0.0
    %437 = vmatprep.subr.mxu0 0.0
    %438 = vmatpush1.msra.mxu0 0.0
    %439 = vmatprep.subr.mxu0 0.0
    %440 = vmatpush1.msra.mxu0 0.0
    %441 = vmatprep.subr.mxu0 0.0
    %442 = vmatpush1.msra.mxu0 0.0
    %443 = vmatprep.subr.mxu0 0.0
    %444 = vmatpush1.msra.mxu0 0.0
    %445 = vmatprep.subr.mxu0 0.0
    %446 = vmatpush1.msra.mxu0 0.0
    %447 = vmatprep.subr.mxu0 0.0
    %448 = vmatpush1.msra.mxu0 0.0
    %449 = vmatprep.subr.mxu0 0.0
    %450 = vmatpush1.msra.mxu0 0.0
    %451 = vmatprep.subr.mxu0 0.0
    %452 = vmatpush1.msra.mxu0 0.0
    %453 = vmatprep.subr.mxu0 0.0
    %454 = vmatpush1.msra.mxu0 0.0
    %455 = vmatprep.subr.mxu0 0.0
    %456 = vmatpush1.msra.mxu0 0.0
    %457 = vmatprep.subr.mxu0 0.0
    %458 = vmatpush1.msra.mxu0 0.0
    %459 = vmatprep.subr.mxu0 0.0
    %460 = vmatpush1.msra.mxu0 0.0
    %461 = vmatprep.subr.mxu0 0.0
    %462 = vmatpush1.msra.mxu0 0.0
    %463 = vmatprep.subr.mxu0 0.0
    %464 = vmatpush1.msra.mxu0 0.0
    %465 = vmatprep.subr.mxu0 0.0
    %466 = vmatpush1.msra.mxu0 0.0
    %467 = vmatprep.subr.mxu0 0.0
    %468 = vmatpush1.msra.mxu0 0.0
    %469 = vmatprep.subr.mxu0 0.0
    %470 = vmatpush1.msra.mxu0 0.0
    %471 = vmatprep.subr.mxu0 0.0
    %472 = vmatpush1.msra.mxu0 0.0
    %473 = vmatprep.subr.mxu0 0.0
    %474 = vmatpush1.msra.mxu0 0.0
    %475 = vmatprep.subr.mxu0 0.0
    %476 = vmatpush1.msra.mxu0 0.0
    %477 = vmatprep.subr.mxu0 0.0
    %478 = vmatpush1.msra.mxu0 0.0
    %479 = vmatprep.subr.mxu0 0.0
    %480 = vmatpush1.msra.mxu0 0.0
    %481 = vmatprep.subr.mxu0 0.0
    %482 = vmatpush1.msra.mxu0 0.0
    %483 = vmatprep.subr.mxu0 0.0
    %484 = vmatpush1.msra.mxu0 0.0
    %485 = vmatprep.subr.mxu0 0.0
    %486 = vmatpush1.msra.mxu0 0.0
    %487 = vmatprep.subr.mxu0 0.0
    %488 = vmatpush1.msra.mxu0 0.0
    %489 = vmatprep.subr.mxu0 0.0
    %490 = vmatpush1.msra.mxu0 0.0
    %491 = vmatprep.subr.mxu0 0.0
    %492 = vmatpush1.msra.mxu0 0.0
    %493 = vmatprep.subr.mxu0 0.0
    %494 = vmatpush1.msra.mxu0 0.0
    %495 = vmatprep.subr.mxu0 0.0
    %496 = vmatpush1.msra.mxu0 0.0
    %497 = vmatprep.mubr.f32.mxu0 0.0
    %498 = vmatmul.mubr.f32.gmra.mrb[0].mxu0 %v431
    %v499 = vpop.f32.mrb[0].mxu0
    %v500 = vadd.f32 0.0, %v499
    %v501 = vpop.f32.mrb[0].mxu0
    %502 = vdwg.mxu0
    %v503 = vld [vmem:[#allocation2] sm:$0xff]
    %v504 = vld [vmem:[#allocation2 + $0x8] sm:$0xff]
    %v505 = vld [vmem:[#allocation2 + $0x10] sm:$0xff]
    %v506 = vld [vmem:[#allocation2 + $0x18] sm:$0xff]
    %v507 = vld [vmem:[#allocation2 + $0x20] sm:$0xff]
    %v508 = vld [vmem:[#allocation2 + $0x28] sm:$0xff]
    %v509 = vld [vmem:[#allocation2 + $0x30] sm:$0xff]
    %v510 = vld [vmem:[#allocation2 + $0x38] sm:$0xff]
    %v511 = vld [vmem:[#allocation2 + $0x40] sm:$0xff]
    %v512 = vld [vmem:[#allocation2 + $0x48] sm:$0xff]
    %v513 = vld [vmem:[#allocation2 + $0x50] sm:$0xff]
    %v514 = vld [vmem:[#allocation2 + $0x58] sm:$0xff]
    %v515 = vld [vmem:[#allocation2 + $0x60] sm:$0xff]
    %v516 = vld [vmem:[#allocation2 + $0x68] sm:$0xff]
    %v517 = vld [vmem:[#allocation2 + $0x70] sm:$0xff]
    %v518 = vld [vmem:[#allocation2 + $0x78] sm:$0xff]
    %v519 = vld [vmem:[#allocation2 + $0x80] sm:$0xff]
    %v520 = vld [vmem:[#allocation2 + $0x88] sm:$0xff]
    %v521 = vld [vmem:[#allocation2 + $0x90] sm:$0xff]
    %v522 = vld [vmem:[#allocation2 + $0x98] sm:$0xff]
    %v523 = vld [vmem:[#allocation2 + $0xa0] sm:$0xff]
    %v524 = vld [vmem:[#allocation2 + $0xa8] sm:$0xff]
    %v525 = vld [vmem:[#allocation2 + $0xb0] sm:$0xff]
    %v526 = vld [vmem:[#allocation2 + $0xb8] sm:$0xff]
    %v527 = vld [vmem:[#allocation2 + $0xc0] sm:$0xff]
    %v528 = vld [vmem:[#allocation2 + $0xc8] sm:$0xff]
    %v529 = vld [vmem:[#allocation2 + $0xd0] sm:$0xff]
    %v530 = vld [vmem:[#allocation2 + $0xd8] sm:$0xff]
    %v531 = vld [vmem:[#allocation2 + $0xe0] sm:$0xff]
    %v532 = vld [vmem:[#allocation2 + $0xe8] sm:$0xff]
    %v533 = vld [vmem:[#allocation2 + $0xf0] sm:$0xff]
    %v534 = vld [vmem:[#allocation2 + $0xf8] sm:$0xff]
    %v535 = vld [vmem:[#allocation2 + $0x100] sm:$0xff]
    %v536 = vld [vmem:[#allocation2 + $0x108] sm:$0xff]
    %v537 = vld [vmem:[#allocation2 + $0x110] sm:$0xff]
    %v538 = vld [vmem:[#allocation2 + $0x118] sm:$0xff]
    %v539 = vld [vmem:[#allocation2 + $0x120] sm:$0xff]
    %v540 = vld [vmem:[#allocation2 + $0x128] sm:$0xff]
    %v541 = vld [vmem:[#allocation2 + $0x130] sm:$0xff]
    %v542 = vld [vmem:[#allocation2 + $0x138] sm:$0xff]
    %v543 = vld [vmem:[#allocation2 + $0x140] sm:$0xff]
    %v544 = vld [vmem:[#allocation2 + $0x148] sm:$0xff]
    %v545 = vld [vmem:[#allocation2 + $0x150] sm:$0xff]
    %v546 = vld [vmem:[#allocation2 + $0x158] sm:$0xff]
    %v547 = vld [vmem:[#allocation2 + $0x160] sm:$0xff]
    %v548 = vld [vmem:[#allocation2 + $0x168] sm:$0xff]
    %v549 = vld [vmem:[#allocation2 + $0x170] sm:$0xff]
    %v550 = vld [vmem:[#allocation2 + $0x178] sm:$0xff]
    %v551 = vld [vmem:[#allocation2 + $0x180] sm:$0xff]
    %v552 = vld [vmem:[#allocation2 + $0x188] sm:$0xff]
    %v553 = vld [vmem:[#allocation2 + $0x190] sm:$0xff]
    %v554 = vld [vmem:[#allocation2 + $0x198] sm:$0xff]
    %v555 = vld [vmem:[#allocation2 + $0x1a0] sm:$0xff]
    %v556 = vld [vmem:[#allocation2 + $0x1a8] sm:$0xff]
    %v557 = vld [vmem:[#allocation2 + $0x1b0] sm:$0xff]
    %v558 = vld [vmem:[#allocation2 + $0x1b8] sm:$0xff]
    %v559 = vld [vmem:[#allocation2 + $0x1c0] sm:$0xff]
    %v560 = vld [vmem:[#allocation2 + $0x1c8] sm:$0xff]
    %v561 = vld [vmem:[#allocation2 + $0x1d0] sm:$0xff]
    %v562 = vld [vmem:[#allocation2 + $0x1d8] sm:$0xff]
    %v563 = vld [vmem:[#allocation2 + $0x1e0] sm:$0xff]
    %v564 = vld [vmem:[#allocation2 + $0x1e8] sm:$0xff]
    %v565 = vld [vmem:[#allocation2 + $0x1f0] sm:$0xff]
    %v566 = vld [vmem:[#allocation2 + $0x1f8] sm:$0xff]
    %v567 = vld [vmem:[#allocation2 + $0x200] sm:$0xff]
    %v568 = vld [vmem:[#allocation2 + $0x208] sm:$0xff]
    %v569 = vld [vmem:[#allocation2 + $0x210] sm:$0xff]
    %v570 = vld [vmem:[#allocation2 + $0x218] sm:$0xff]
    %v571 = vld [vmem:[#allocation2 + $0x220] sm:$0xff]
    %v572 = vld [vmem:[#allocation2 + $0x228] sm:$0xff]
    %v573 = vld [vmem:[#allocation2 + $0x230] sm:$0xff]
    %v574 = vld [vmem:[#allocation2 + $0x238] sm:$0xff]
    %v575 = vld [vmem:[#allocation2 + $0x240] sm:$0xff]
    %v576 = vld [vmem:[#allocation2 + $0x248] sm:$0xff]
    %v577 = vld [vmem:[#allocation2 + $0x250] sm:$0xff]
    %v578 = vld [vmem:[#allocation2 + $0x258] sm:$0xff]
    %v579 = vld [vmem:[#allocation2 + $0x260] sm:$0xff]
    %v580 = vld [vmem:[#allocation2 + $0x268] sm:$0xff]
    %v581 = vld [vmem:[#allocation2 + $0x270] sm:$0xff]
    %v582 = vld [vmem:[#allocation2 + $0x278] sm:$0xff]
    %v583 = vld [vmem:[#allocation2 + $0x280] sm:$0xff]
    %v584 = vld [vmem:[#allocation2 + $0x288] sm:$0xff]
    %v585 = vld [vmem:[#allocation2 + $0x290] sm:$0xff]
    %v586 = vld [vmem:[#allocation2 + $0x298] sm:$0xff]
    %v587 = vld [vmem:[#allocation2 + $0x2a0] sm:$0xff]
    %v588 = vld [vmem:[#allocation2 + $0x2a8] sm:$0xff]
    %v589 = vld [vmem:[#allocation2 + $0x2b0] sm:$0xff]
    %v590 = vld [vmem:[#allocation2 + $0x2b8] sm:$0xff]
    %v591 = vld [vmem:[#allocation2 + $0x2c0] sm:$0xff]
    %v592 = vld [vmem:[#allocation2 + $0x2c8] sm:$0xff]
    %v593 = vld [vmem:[#allocation2 + $0x2d0] sm:$0xff]
    %v594 = vld [vmem:[#allocation2 + $0x2d8] sm:$0xff]
    %v595 = vld [vmem:[#allocation2 + $0x2e0] sm:$0xff]
    %v596 = vld [vmem:[#allocation2 + $0x2e8] sm:$0xff]
    %v597 = vld [vmem:[#allocation2 + $0x2f0] sm:$0xff]
    %v598 = vld [vmem:[#allocation2 + $0x2f8] sm:$0xff]
    %v599 = vld [vmem:[#allocation2 + $0x300] sm:$0xff]
    %v600 = vld [vmem:[#allocation2 + $0x308] sm:$0xff]
    %v601 = vld [vmem:[#allocation2 + $0x310] sm:$0xff]
    %v602 = vld [vmem:[#allocation2 + $0x318] sm:$0xff]
    %v603 = vld [vmem:[#allocation2 + $0x320] sm:$0xff]
    %v604 = vld [vmem:[#allocation2 + $0x328] sm:$0xff]
    %v605 = vld [vmem:[#allocation2 + $0x330] sm:$0xff]
    %v606 = vld [vmem:[#allocation2 + $0x338] sm:$0xff]
    %v607 = vld [vmem:[#allocation2 + $0x340] sm:$0xff]
    %v608 = vld [vmem:[#allocation2 + $0x348] sm:$0xff]
    %v609 = vld [vmem:[#allocation2 + $0x350] sm:$0xff]
    %v610 = vld [vmem:[#allocation2 + $0x358] sm:$0xff]
    %v611 = vld [vmem:[#allocation2 + $0x360] sm:$0xff]
    %v612 = vld [vmem:[#allocation2 + $0x368] sm:$0xff]
    %v613 = vld [vmem:[#allocation2 + $0x370] sm:$0xff]
    %v614 = vld [vmem:[#allocation2 + $0x378] sm:$0xff]
    %v615 = vld [vmem:[#allocation2 + $0x380] sm:$0xff]
    %v616 = vld [vmem:[#allocation2 + $0x388] sm:$0xff]
    %v617 = vld [vmem:[#allocation2 + $0x390] sm:$0xff]
    %v618 = vld [vmem:[#allocation2 + $0x398] sm:$0xff]
    %v619 = vld [vmem:[#allocation2 + $0x3a0] sm:$0xff]
    %v620 = vld [vmem:[#allocation2 + $0x3a8] sm:$0xff]
    %v621 = vld [vmem:[#allocation2 + $0x3b0] sm:$0xff]
    %v622 = vld [vmem:[#allocation2 + $0x3b8] sm:$0xff]
    %v623 = vld [vmem:[#allocation2 + $0x3c0] sm:$0xff]
    %v624 = vld [vmem:[#allocation2 + $0x3c8] sm:$0xff]
    %v625 = vld [vmem:[#allocation2 + $0x3d0] sm:$0xff]
    %v626 = vld [vmem:[#allocation2 + $0x3d8] sm:$0xff]
    %v627 = vld [vmem:[#allocation2 + $0x3e0] sm:$0xff]
    %v628 = vld [vmem:[#allocation2 + $0x3e8] sm:$0xff]
    %v629 = vld [vmem:[#allocation2 + $0x3f0] sm:$0xff]
    %v630 = vld [vmem:[#allocation2 + $0x3f8] sm:$0xff]
    %v631 = vld [vmem:[#allocation2 + $0x400] sm:$0xff]
    %v632 = vld [vmem:[#allocation2 + $0x408] sm:$0xff]
    %v633 = vld [vmem:[#allocation2 + $0x410] sm:$0xff]
    %v634 = vld [vmem:[#allocation2 + $0x418] sm:$0xff]
    %v635 = vld [vmem:[#allocation2 + $0x420] sm:$0xff]
    %v636 = vld [vmem:[#allocation2 + $0x428] sm:$0xff]
    %v637 = vld [vmem:[#allocation2 + $0x430] sm:$0xff]
    %v638 = vld [vmem:[#allocation2 + $0x438] sm:$0xff]
    %v639 = vld [vmem:[#allocation2 + $0x440] sm:$0xff]
    %v640 = vld [vmem:[#allocation2 + $0x448] sm:$0xff]
    %v641 = vld [vmem:[#allocation2 + $0x450] sm:$0xff]
    %v642 = vld [vmem:[#allocation2 + $0x458] sm:$0xff]
    %v643 = vld [vmem:[#allocation2 + $0x460] sm:$0xff]
    %v644 = vld [vmem:[#allocation2 + $0x468] sm:$0xff]
    %v645 = vld [vmem:[#allocation2 + $0x470] sm:$0xff]
    %v646 = vld [vmem:[#allocation2 + $0x478] sm:$0xff]
    %v647 = vld [vmem:[#allocation2 + $0x480] sm:$0xff]
    %v648 = vld [vmem:[#allocation2 + $0x488] sm:$0xff]
    %v649 = vld [vmem:[#allocation2 + $0x490] sm:$0xff]
    %v650 = vld [vmem:[#allocation2 + $0x498] sm:$0xff]
    %v651 = vld [vmem:[#allocation2 + $0x4a0] sm:$0xff]
    %v652 = vld [vmem:[#allocation2 + $0x4a8] sm:$0xff]
    %v653 = vld [vmem:[#allocation2 + $0x4b0] sm:$0xff]
    %v654 = vld [vmem:[#allocation2 + $0x4b8] sm:$0xff]
    %v655 = vld [vmem:[#allocation2 + $0x4c0] sm:$0xff]
    %v656 = vld [vmem:[#allocation2 + $0x4c8] sm:$0xff]
    %v657 = vld [vmem:[#allocation2 + $0x4d0] sm:$0xff]
    %v658 = vld [vmem:[#allocation2 + $0x4d8] sm:$0xff]
    %v659 = vld [vmem:[#allocation2 + $0x4e0] sm:$0xff]
    %v660 = vld [vmem:[#allocation2 + $0x4e8] sm:$0xff]
    %v661 = vld [vmem:[#allocation2 + $0x4f0] sm:$0xff]
    %v662 = vld [vmem:[#allocation2 + $0x4f8] sm:$0xff]
    %663 = vmatprep.subr.mxu0 %v504
    %664 = vmatpush1.msra.mxu0 %v503
    %665 = vmatprep.subr.mxu0 %v509
    %666 = vmatpush1.msra.mxu0 %v508
    %667 = vmatprep.subr.mxu0 %v514
    %668 = vmatpush1.msra.mxu0 %v513
    %669 = vmatprep.subr.mxu0 %v519
    %670 = vmatpush1.msra.mxu0 %v518
    %671 = vmatprep.subr.mxu0 %v524
    %672 = vmatpush1.msra.mxu0 %v523
    %673 = vmatprep.subr.mxu0 %v529
    %674 = vmatpush1.msra.mxu0 %v528
    %675 = vmatprep.subr.mxu0 %v534
    %676 = vmatpush1.msra.mxu0 %v533
    %677 = vmatprep.subr.mxu0 %v539
    %678 = vmatpush1.msra.mxu0 %v538
    %679 = vmatprep.subr.mxu0 %v544
    %680 = vmatpush1.msra.mxu0 %v543
    %681 = vmatprep.subr.mxu0 %v549
    %682 = vmatpush1.msra.mxu0 %v548
    %683 = vmatprep.subr.mxu0 %v554
    %684 = vmatpush1.msra.mxu0 %v553
    %685 = vmatprep.subr.mxu0 %v559
    %686 = vmatpush1.msra.mxu0 %v558
    %687 = vmatprep.subr.mxu0 %v564
    %688 = vmatpush1.msra.mxu0 %v563
    %689 = vmatprep.subr.mxu0 %v569
    %690 = vmatpush1.msra.mxu0 %v568
    %691 = vmatprep.subr.mxu0 %v574
    %692 = vmatpush1.msra.mxu0 %v573
    %693 = vmatprep.subr.mxu0 %v579
    %694 = vmatpush1.msra.mxu0 %v578
    %695 = vmatprep.subr.mxu0 %v584
    %696 = vmatpush1.msra.mxu0 %v583
    %697 = vmatprep.subr.mxu0 %v589
    %698 = vmatpush1.msra.mxu0 %v588
    %699 = vmatprep.subr.mxu0 %v594
    %700 = vmatpush1.msra.mxu0 %v593
    %701 = vmatprep.subr.mxu0 %v599
    %702 = vmatpush1.msra.mxu0 %v598
    %703 = vmatprep.subr.mxu0 %v604
    %704 = vmatpush1.msra.mxu0 %v603
    %705 = vmatprep.subr.mxu0 %v609
    %706 = vmatpush1.msra.mxu0 %v608
    %707 = vmatprep.subr.mxu0 %v614
    %708 = vmatpush1.msra.mxu0 %v613
    %709 = vmatprep.subr.mxu0 %v619
    %710 = vmatpush1.msra.mxu0 %v618
    %711 = vmatprep.subr.mxu0 %v624
    %712 = vmatpush1.msra.mxu0 %v623
    %713 = vmatprep.subr.mxu0 %v629
    %714 = vmatpush1.msra.mxu0 %v628
    %715 = vmatprep.subr.mxu0 %v634
    %716 = vmatpush1.msra.mxu0 %v633
    %717 = vmatprep.subr.mxu0 %v639
    %718 = vmatpush1.msra.mxu0 %v638
    %719 = vmatprep.subr.mxu0 %v644
    %720 = vmatpush1.msra.mxu0 %v643
    %721 = vmatprep.subr.mxu0 %v649
    %722 = vmatpush1.msra.mxu0 %v648
    %723 = vmatprep.subr.mxu0 %v654
    %724 = vmatpush1.msra.mxu0 %v653
    %725 = vmatprep.subr.mxu0 %v659
    %726 = vmatpush1.msra.mxu0 %v658
    %727 = vmatprep.mubr.f32.mxu0 %v59
    %728 = vmatmul.mubr.f32.gmra.mrb[0].mxu0 %v237
    %v729 = vpop.f32.mrb[0].mxu0
    %v730 = vadd.f32 0.0, %v729
    %v731 = vpop.f32.mrb[0].mxu0
    %v732 = vadd.f32 0.0, %v731
    %733 = vdwg.mxu0
    %734 = vmatprep.subr.mxu0 %v506
    %735 = vmatpush1.msra.mxu0 %v505
    %736 = vmatprep.subr.mxu0 %v511
    %737 = vmatpush1.msra.mxu0 %v510
    %738 = vmatprep.subr.mxu0 %v516
    %739 = vmatpush1.msra.mxu0 %v515
    %740 = vmatprep.subr.mxu0 %v521
    %741 = vmatpush1.msra.mxu0 %v520
    %742 = vmatprep.subr.mxu0 %v526
    %743 = vmatpush1.msra.mxu0 %v525
    %744 = vmatprep.subr.mxu0 %v531
    %745 = vmatpush1.msra.mxu0 %v530
    %746 = vmatprep.subr.mxu0 %v536
    %747 = vmatpush1.msra.mxu0 %v535
    %748 = vmatprep.subr.mxu0 %v541
    %749 = vmatpush1.msra.mxu0 %v540
    %750 = vmatprep.subr.mxu0 %v546
    %751 = vmatpush1.msra.mxu0 %v545
    %752 = vmatprep.subr.mxu0 %v551
    %753 = vmatpush1.msra.mxu0 %v550
    %754 = vmatprep.subr.mxu0 %v556
    %755 = vmatpush1.msra.mxu0 %v555
    %756 = vmatprep.subr.mxu0 %v561
    %757 = vmatpush1.msra.mxu0 %v560
    %758 = vmatprep.subr.mxu0 %v566
    %759 = vmatpush1.msra.mxu0 %v565
    %760 = vmatprep.subr.mxu0 %v571
    %761 = vmatpush1.msra.mxu0 %v570
    %762 = vmatprep.subr.mxu0 %v576
    %763 = vmatpush1.msra.mxu0 %v575
    %764 = vmatprep.subr.mxu0 %v581
    %765 = vmatpush1.msra.mxu0 %v580
    %766 = vmatprep.subr.mxu0 %v586
    %767 = vmatpush1.msra.mxu0 %v585
    %768 = vmatprep.subr.mxu0 %v591
    %769 = vmatpush1.msra.mxu0 %v590
    %770 = vmatprep.subr.mxu0 %v596
    %771 = vmatpush1.msra.mxu0 %v595
    %772 = vmatprep.subr.mxu0 %v601
    %773 = vmatpush1.msra.mxu0 %v600
    %774 = vmatprep.subr.mxu0 %v606
    %775 = vmatpush1.msra.mxu0 %v605
    %776 = vmatprep.subr.mxu0 %v611
    %777 = vmatpush1.msra.mxu0 %v610
    %778 = vmatprep.subr.mxu0 %v616
    %779 = vmatpush1.msra.mxu0 %v615
    %780 = vmatprep.subr.mxu0 %v621
    %781 = vmatpush1.msra.mxu0 %v620
    %782 = vmatprep.subr.mxu0 %v626
    %783 = vmatpush1.msra.mxu0 %v625
    %784 = vmatprep.subr.mxu0 %v631
    %785 = vmatpush1.msra.mxu0 %v630
    %786 = vmatprep.subr.mxu0 %v636
    %787 = vmatpush1.msra.mxu0 %v635
    %788 = vmatprep.subr.mxu0 %v641
    %789 = vmatpush1.msra.mxu0 %v640
    %790 = vmatprep.subr.mxu0 %v646
    %791 = vmatpush1.msra.mxu0 %v645
    %792 = vmatprep.subr.mxu0 %v651
    %793 = vmatpush1.msra.mxu0 %v650
    %794 = vmatprep.subr.mxu0 %v656
    %795 = vmatpush1.msra.mxu0 %v655
    %796 = vmatprep.subr.mxu0 %v661
    %797 = vmatpush1.msra.mxu0 %v660
    %798 = vmatprep.mubr.f32.mxu0 %v59
    %799 = vmatmul.mubr.f32.gmra.mrb[0].mxu0 %v237
    %v800 = vpop.f32.mrb[0].mxu0
    %v801 = vadd.f32 0.0, %v800
    %v802 = vpop.f32.mrb[0].mxu0
    %v803 = vadd.f32 0.0, %v802
    %804 = vdwg.mxu0
    %805 = vmatprep.subr.mxu0 0.0
    %806 = vmatpush1.msra.mxu0 %v507
    %807 = vmatprep.subr.mxu0 0.0
    %808 = vmatpush1.msra.mxu0 %v512
    %809 = vmatprep.subr.mxu0 0.0
    %810 = vmatpush1.msra.mxu0 %v517
    %811 = vmatprep.subr.mxu0 0.0
    %812 = vmatpush1.msra.mxu0 %v522
    %813 = vmatprep.subr.mxu0 0.0
    %814 = vmatpush1.msra.mxu0 %v527
    %815 = vmatprep.subr.mxu0 0.0
    %816 = vmatpush1.msra.mxu0 %v532
    %817 = vmatprep.subr.mxu0 0.0
    %818 = vmatpush1.msra.mxu0 %v537
    %819 = vmatprep.subr.mxu0 0.0
    %820 = vmatpush1.msra.mxu0 %v542
    %821 = vmatprep.subr.mxu0 0.0
    %822 = vmatpush1.msra.mxu0 %v547
    %823 = vmatprep.subr.mxu0 0.0
    %824 = vmatpush1.msra.mxu0 %v552
    %825 = vmatprep.subr.mxu0 0.0
    %826 = vmatpush1.msra.mxu0 %v557
    %827 = vmatprep.subr.mxu0 0.0
    %828 = vmatpush1.msra.mxu0 %v562
    %829 = vmatprep.subr.mxu0 0.0
    %830 = vmatpush1.msra.mxu0 %v567
    %831 = vmatprep.subr.mxu0 0.0
    %832 = vmatpush1.msra.mxu0 %v572
    %833 = vmatprep.subr.mxu0 0.0
    %834 = vmatpush1.msra.mxu0 %v577
    %835 = vmatprep.subr.mxu0 0.0
    %836 = vmatpush1.msra.mxu0 %v582
    %837 = vmatprep.subr.mxu0 0.0
    %838 = vmatpush1.msra.mxu0 %v587
    %839 = vmatprep.subr.mxu0 0.0
    %840 = vmatpush1.msra.mxu0 %v592
    %841 = vmatprep.subr.mxu0 0.0
    %842 = vmatpush1.msra.mxu0 %v597
    %843 = vmatprep.subr.mxu0 0.0
    %844 = vmatpush1.msra.mxu0 %v602
    %845 = vmatprep.subr.mxu0 0.0
    %846 = vmatpush1.msra.mxu0 %v607
    %847 = vmatprep.subr.mxu0 0.0
    %848 = vmatpush1.msra.mxu0 %v612
    %849 = vmatprep.subr.mxu0 0.0
    %850 = vmatpush1.msra.mxu0 %v617
    %851 = vmatprep.subr.mxu0 0.0
    %852 = vmatpush1.msra.mxu0 %v622
    %853 = vmatprep.subr.mxu0 0.0
    %854 = vmatpush1.msra.mxu0 %v627
    %855 = vmatprep.subr.mxu0 0.0
    %856 = vmatpush1.msra.mxu0 %v632
    %857 = vmatprep.subr.mxu0 0.0
    %858 = vmatpush1.msra.mxu0 %v637
    %859 = vmatprep.subr.mxu0 0.0
    %860 = vmatpush1.msra.mxu0 %v642
    %861 = vmatprep.subr.mxu0 0.0
    %862 = vmatpush1.msra.mxu0 %v647
    %863 = vmatprep.subr.mxu0 0.0
    %864 = vmatpush1.msra.mxu0 %v652
    %865 = vmatprep.subr.mxu0 0.0
    %866 = vmatpush1.msra.mxu0 %v657
    %867 = vmatprep.subr.mxu0 0.0
    %868 = vmatpush1.msra.mxu0 %v662
    %869 = vmatprep.mubr.f32.mxu0 %v59
    %870 = vmatmul.mubr.f32.gmra.mrb[0].mxu0 %v237
    %v871 = vpop.f32.mrb[0].mxu0
    %v872 = vadd.f32 0.0, %v871
    %v873 = vpop.f32.mrb[0].mxu0
    %874 = vdwg.mxu0
    %v875 = vxor.u32 %v730, 2147483648
    %v876 = vmul.f32 %v875, 1.442695
    %v877 = vpow.pop %v876
    %v878 = vadd.f32 %v877, 1.0
    %v879 = vrcp.pop %v878
    %v880 = vmul.f32 1.0, %v879
    %v881 = vxor.u32 %v732, 2147483648
    %v882 = vmul.f32 %v881, 1.442695
    %v883 = vpow.pop %v882
    %v884 = vadd.f32 %v883, 1.0
    %v885 = vrcp.pop %v884
    %v886 = vmul.f32 1.0, %v885
    %v887 = vxor.u32 %v801, 2147483648
    %v888 = vmul.f32 %v887, 1.442695
    %v889 = vpow.pop %v888
    %v890 = vadd.f32 %v889, 1.0
    %v891 = vrcp.pop %v890
    %v892 = vmul.f32 1.0, %v891
    %v893 = vxor.u32 %v803, 2147483648
    %v894 = vmul.f32 %v893, 1.442695
    %v895 = vpow.pop %v894
    %v896 = vadd.f32 %v895, 1.0
    %v897 = vrcp.pop %v896
    %v898 = vmul.f32 1.0, %v897
    %v899 = vtanh.pop %v872
    %v900 = vmul.f32 %v886, %v60
    %v901 = vmul.f32 %v880, %v899
    %v902 = vadd.f32 %v900, %v901
    %v903 = vmul.f32 %v898, %v408
    %v904 = vadd.f32 %v902, %v903
    %v905 = vtanh.pop %v904
    %v906 = vmul.f32 %v892, %v905
    %v907 = vld [vmem:[#allocation4] sm:$0xff]
    %v908 = vld [vmem:[#allocation4 + $0x8] sm:$0xff]
    %v909 = vld [vmem:[#allocation4 + $0x10] sm:$0xff]
    %v910 = vld [vmem:[#allocation4 + $0x18] sm:$0xff]
    %v911 = vld [vmem:[#allocation4 + $0x20] sm:$0xff]
    %v912 = vld [vmem:[#allocation4 + $0x28] sm:$0xff]
    %v913 = vld [vmem:[#allocation4 + $0x30] sm:$0xff]
    %v914 = vld [vmem:[#allocation4 + $0x38] sm:$0xff]
    %v915 = vld [vmem:[#allocation4 + $0x40] sm:$0xff]
    %v916 = vld [vmem:[#allocation4 + $0x48] sm:$0xff]
    %v917 = vld [vmem:[#allocation4 + $0x50] sm:$0xff]
    %v918 = vld [vmem:[#allocation4 + $0x58] sm:$0xff]
    %v919 = vld [vmem:[#allocation4 + $0x60] sm:$0xff]
    %v920 = vld [vmem:[#allocation4 + $0x68] sm:$0xff]
    %v921 = vld [vmem:[#allocation4 + $0x70] sm:$0xff]
    %v922 = vld [vmem:[#allocation4 + $0x78] sm:$0xff]
    %v923 = vld [vmem:[#allocation4 + $0x80] sm:$0xff]
    %v924 = vld [vmem:[#allocation4 + $0x88] sm:$0xff]
    %v925 = vld [vmem:[#allocation4 + $0x90] sm:$0xff]
    %v926 = vld [vmem:[#allocation4 + $0x98] sm:$0xff]
    %v927 = vld [vmem:[#allocation4 + $0xa0] sm:$0xff]
    %v928 = vld [vmem:[#allocation4 + $0xa8] sm:$0xff]
    %v929 = vld [vmem:[#allocation4 + $0xb0] sm:$0xff]
    %v930 = vld [vmem:[#allocation4 + $0xb8] sm:$0xff]
    %v931 = vld [vmem:[#allocation4 + $0xc0] sm:$0xff]
    %v932 = vld [vmem:[#allocation4 + $0xc8] sm:$0xff]
    %v933 = vld [vmem:[#allocation4 + $0xd0] sm:$0xff]
    %v934 = vld [vmem:[#allocation4 + $0xd8] sm:$0xff]
    %v935 = vld [vmem:[#allocation4 + $0xe0] sm:$0xff]
    %v936 = vld [vmem:[#allocation4 + $0xe8] sm:$0xff]
    %v937 = vld [vmem:[#allocation4 + $0xf0] sm:$0xff]
    %v938 = vld [vmem:[#allocation4 + $0xf8] sm:$0xff]
    %v939 = vld [vmem:[#allocation4 + $0x100] sm:$0xff]
    %v940 = vld [vmem:[#allocation4 + $0x108] sm:$0xff]
    %v941 = vld [vmem:[#allocation4 + $0x110] sm:$0xff]
    %v942 = vld [vmem:[#allocation4 + $0x118] sm:$0xff]
    %v943 = vld [vmem:[#allocation4 + $0x120] sm:$0xff]
    %v944 = vld [vmem:[#allocation4 + $0x128] sm:$0xff]
    %v945 = vld [vmem:[#allocation4 + $0x130] sm:$0xff]
    %v946 = vld [vmem:[#allocation4 + $0x138] sm:$0xff]
    %v947 = vld [vmem:[#allocation4 + $0x140] sm:$0xff]
    %v948 = vld [vmem:[#allocation4 + $0x148] sm:$0xff]
    %v949 = vld [vmem:[#allocation4 + $0x150] sm:$0xff]
    %v950 = vld [vmem:[#allocation4 + $0x158] sm:$0xff]
    %v951 = vld [vmem:[#allocation4 + $0x160] sm:$0xff]
    %v952 = vld [vmem:[#allocation4 + $0x168] sm:$0xff]
    %v953 = vld [vmem:[#allocation4 + $0x170] sm:$0xff]
    %v954 = vld [vmem:[#allocation4 + $0x178] sm:$0xff]
    %v955 = vld [vmem:[#allocation4 + $0x180] sm:$0xff]
    %v956 = vld [vmem:[#allocation4 + $0x188] sm:$0xff]
    %v957 = vld [vmem:[#allocation4 + $0x190] sm:$0xff]
    %v958 = vld [vmem:[#allocation4 + $0x198] sm:$0xff]
    %v959 = vld [vmem:[#allocation4 + $0x1a0] sm:$0xff]
    %v960 = vld [vmem:[#allocation4 + $0x1a8] sm:$0xff]
    %v961 = vld [vmem:[#allocation4 + $0x1b0] sm:$0xff]
    %v962 = vld [vmem:[#allocation4 + $0x1b8] sm:$0xff]
    %v963 = vld [vmem:[#allocation4 + $0x1c0] sm:$0xff]
    %v964 = vld [vmem:[#allocation4 + $0x1c8] sm:$0xff]
    %v965 = vld [vmem:[#allocation4 + $0x1d0] sm:$0xff]
    %v966 = vld [vmem:[#allocation4 + $0x1d8] sm:$0xff]
    %v967 = vld [vmem:[#allocation4 + $0x1e0] sm:$0xff]
    %v968 = vld [vmem:[#allocation4 + $0x1e8] sm:$0xff]
    %v969 = vld [vmem:[#allocation4 + $0x1f0] sm:$0xff]
    %v970 = vld [vmem:[#allocation4 + $0x1f8] sm:$0xff]
    %v971 = vld [vmem:[#allocation4 + $0x200] sm:$0xff]
    %v972 = vld [vmem:[#allocation4 + $0x208] sm:$0xff]
    %v973 = vld [vmem:[#allocation4 + $0x210] sm:$0xff]
    %v974 = vld [vmem:[#allocation4 + $0x218] sm:$0xff]
    %v975 = vld [vmem:[#allocation4 + $0x220] sm:$0xff]
    %v976 = vld [vmem:[#allocation4 + $0x228] sm:$0xff]
    %v977 = vld [vmem:[#allocation4 + $0x230] sm:$0xff]
    %v978 = vld [vmem:[#allocation4 + $0x238] sm:$0xff]
    %v979 = vld [vmem:[#allocation4 + $0x240] sm:$0xff]
    %v980 = vld [vmem:[#allocation4 + $0x248] sm:$0xff]
    %v981 = vld [vmem:[#allocation4 + $0x250] sm:$0xff]
    %v982 = vld [vmem:[#allocation4 + $0x258] sm:$0xff]
    %v983 = vld [vmem:[#allocation4 + $0x260] sm:$0xff]
    %v984 = vld [vmem:[#allocation4 + $0x268] sm:$0xff]
    %v985 = vld [vmem:[#allocation4 + $0x270] sm:$0xff]
    %v986 = vld [vmem:[#allocation4 + $0x278] sm:$0xff]
    %v987 = vld [vmem:[#allocation4 + $0x280] sm:$0xff]
    %v988 = vld [vmem:[#allocation4 + $0x288] sm:$0xff]
    %v989 = vld [vmem:[#allocation4 + $0x290] sm:$0xff]
    %v990 = vld [vmem:[#allocation4 + $0x298] sm:$0xff]
    %v991 = vld [vmem:[#allocation4 + $0x2a0] sm:$0xff]
    %v992 = vld [vmem:[#allocation4 + $0x2a8] sm:$0xff]
    %v993 = vld [vmem:[#allocation4 + $0x2b0] sm:$0xff]
    %v994 = vld [vmem:[#allocation4 + $0x2b8] sm:$0xff]
    %v995 = vld [vmem:[#allocation4 + $0x2c0] sm:$0xff]
    %v996 = vld [vmem:[#allocation4 + $0x2c8] sm:$0xff]
    %v997 = vld [vmem:[#allocation4 + $0x2d0] sm:$0xff]
    %v998 = vld [vmem:[#allocation4 + $0x2d8] sm:$0xff]
    %v999 = vld [vmem:[#allocation4 + $0x2e0] sm:$0xff]
    %v1000 = vld [vmem:[#allocation4 + $0x2e8] sm:$0xff]
    %v1001 = vld [vmem:[#allocation4 + $0x2f0] sm:$0xff]
    %v1002 = vld [vmem:[#allocation4 + $0x2f8] sm:$0xff]
    %v1003 = vld [vmem:[#allocation4 + $0x300] sm:$0xff]
    %v1004 = vld [vmem:[#allocation4 + $0x308] sm:$0xff]
    %v1005 = vld [vmem:[#allocation4 + $0x310] sm:$0xff]
    %v1006 = vld [vmem:[#allocation4 + $0x318] sm:$0xff]
    %v1007 = vld [vmem:[#allocation4 + $0x320] sm:$0xff]
    %v1008 = vld [vmem:[#allocation4 + $0x328] sm:$0xff]
    %v1009 = vld [vmem:[#allocation4 + $0x330] sm:$0xff]
    %v1010 = vld [vmem:[#allocation4 + $0x338] sm:$0xff]
    %v1011 = vld [vmem:[#allocation4 + $0x340] sm:$0xff]
    %v1012 = vld [vmem:[#allocation4 + $0x348] sm:$0xff]
    %v1013 = vld [vmem:[#allocation4 + $0x350] sm:$0xff]
    %v1014 = vld [vmem:[#allocation4 + $0x358] sm:$0xff]
    %v1015 = vld [vmem:[#allocation4 + $0x360] sm:$0xff]
    %v1016 = vld [vmem:[#allocation4 + $0x368] sm:$0xff]
    %v1017 = vld [vmem:[#allocation4 + $0x370] sm:$0xff]
    %v1018 = vld [vmem:[#allocation4 + $0x378] sm:$0xff]
    %v1019 = vld [vmem:[#allocation4 + $0x380] sm:$0xff]
    %v1020 = vld [vmem:[#allocation4 + $0x388] sm:$0xff]
    %v1021 = vld [vmem:[#allocation4 + $0x390] sm:$0xff]
    %v1022 = vld [vmem:[#allocation4 + $0x398] sm:$0xff]
    %v1023 = vld [vmem:[#allocation4 + $0x3a0] sm:$0xff]
    %v1024 = vld [vmem:[#allocation4 + $0x3a8] sm:$0xff]
    %v1025 = vld [vmem:[#allocation4 + $0x3b0] sm:$0xff]
    %v1026 = vld [vmem:[#allocation4 + $0x3b8] sm:$0xff]
    %v1027 = vld [vmem:[#allocation4 + $0x3c0] sm:$0xff]
    %v1028 = vld [vmem:[#allocation4 + $0x3c8] sm:$0xff]
    %v1029 = vld [vmem:[#allocation4 + $0x3d0] sm:$0xff]
    %v1030 = vld [vmem:[#allocation4 + $0x3d8] sm:$0xff]
    %v1031 = vld [vmem:[#allocation4 + $0x3e0] sm:$0xff]
    %v1032 = vld [vmem:[#allocation4 + $0x3e8] sm:$0xff]
    %v1033 = vld [vmem:[#allocation4 + $0x3f0] sm:$0xff]
    %v1034 = vld [vmem:[#allocation4 + $0x3f8] sm:$0xff]
    %v1035 = vld [vmem:[#allocation4 + $0x400] sm:$0xff]
    %v1036 = vld [vmem:[#allocation4 + $0x408] sm:$0xff]
    %v1037 = vld [vmem:[#allocation4 + $0x410] sm:$0xff]
    %v1038 = vld [vmem:[#allocation4 + $0x418] sm:$0xff]
    %v1039 = vld [vmem:[#allocation4 + $0x420] sm:$0xff]
    %v1040 = vld [vmem:[#allocation4 + $0x428] sm:$0xff]
    %v1041 = vld [vmem:[#allocation4 + $0x430] sm:$0xff]
    %v1042 = vld [vmem:[#allocation4 + $0x438] sm:$0xff]
    %v1043 = vld [vmem:[#allocation4 + $0x440] sm:$0xff]
    %v1044 = vld [vmem:[#allocation4 + $0x448] sm:$0xff]
    %v1045 = vld [vmem:[#allocation4 + $0x450] sm:$0xff]
    %v1046 = vld [vmem:[#allocation4 + $0x458] sm:$0xff]
    %v1047 = vld [vmem:[#allocation4 + $0x460] sm:$0xff]
    %v1048 = vld [vmem:[#allocation4 + $0x468] sm:$0xff]
    %v1049 = vld [vmem:[#allocation4 + $0x470] sm:$0xff]
    %v1050 = vld [vmem:[#allocation4 + $0x478] sm:$0xff]
    %v1051 = vld [vmem:[#allocation4 + $0x480] sm:$0xff]
    %v1052 = vld [vmem:[#allocation4 + $0x488] sm:$0xff]
    %v1053 = vld [vmem:[#allocation4 + $0x490] sm:$0xff]
    %v1054 = vld [vmem:[#allocation4 + $0x498] sm:$0xff]
    %v1055 = vld [vmem:[#allocation4 + $0x4a0] sm:$0xff]
    %v1056 = vld [vmem:[#allocation4 + $0x4a8] sm:$0xff]
    %v1057 = vld [vmem:[#allocation4 + $0x4b0] sm:$0xff]
    %v1058 = vld [vmem:[#allocation4 + $0x4b8] sm:$0xff]
    %v1059 = vld [vmem:[#allocation4 + $0x4c0] sm:$0xff]
    %v1060 = vld [vmem:[#allocation4 + $0x4c8] sm:$0xff]
    %v1061 = vld [vmem:[#allocation4 + $0x4d0] sm:$0xff]
    %v1062 = vld [vmem:[#allocation4 + $0x4d8] sm:$0xff]
    %v1063 = vld [vmem:[#allocation4 + $0x4e0] sm:$0xff]
    %v1064 = vld [vmem:[#allocation4 + $0x4e8] sm:$0xff]
    %v1065 = vld [vmem:[#allocation4 + $0x4f0] sm:$0xff]
    %v1066 = vld [vmem:[#allocation4 + $0x4f8] sm:$0xff]
    %v1067 = vld [vmem:[#allocation4 + $0x500] sm:$0xff]
    %v1068 = vld [vmem:[#allocation4 + $0x508] sm:$0xff]
    %v1069 = vld [vmem:[#allocation4 + $0x510] sm:$0xff]
    %v1070 = vld [vmem:[#allocation4 + $0x518] sm:$0xff]
    %v1071 = vld [vmem:[#allocation4 + $0x520] sm:$0xff]
    %v1072 = vld [vmem:[#allocation4 + $0x528] sm:$0xff]
    %v1073 = vld [vmem:[#allocation4 + $0x530] sm:$0xff]
    %v1074 = vld [vmem:[#allocation4 + $0x538] sm:$0xff]
    %v1075 = vld [vmem:[#allocation4 + $0x540] sm:$0xff]
    %v1076 = vld [vmem:[#allocation4 + $0x548] sm:$0xff]
    %v1077 = vld [vmem:[#allocation4 + $0x550] sm:$0xff]
    %v1078 = vld [vmem:[#allocation4 + $0x558] sm:$0xff]
    %v1079 = vld [vmem:[#allocation4 + $0x560] sm:$0xff]
    %v1080 = vld [vmem:[#allocation4 + $0x568] sm:$0xff]
    %v1081 = vld [vmem:[#allocation4 + $0x570] sm:$0xff]
    %v1082 = vld [vmem:[#allocation4 + $0x578] sm:$0xff]
    %v1083 = vld [vmem:[#allocation4 + $0x580] sm:$0xff]
    %v1084 = vld [vmem:[#allocation4 + $0x588] sm:$0xff]
    %v1085 = vld [vmem:[#allocation4 + $0x590] sm:$0xff]
    %v1086 = vld [vmem:[#allocation4 + $0x598] sm:$0xff]
    %v1087 = vld [vmem:[#allocation4 + $0x5a0] sm:$0xff]
    %v1088 = vld [vmem:[#allocation4 + $0x5a8] sm:$0xff]
    %v1089 = vld [vmem:[#allocation4 + $0x5b0] sm:$0xff]
    %v1090 = vld [vmem:[#allocation4 + $0x5b8] sm:$0xff]
    %v1091 = vld [vmem:[#allocation4 + $0x5c0] sm:$0xff]
    %v1092 = vld [vmem:[#allocation4 + $0x5c8] sm:$0xff]
    %v1093 = vld [vmem:[#allocation4 + $0x5d0] sm:$0xff]
    %v1094 = vld [vmem:[#allocation4 + $0x5d8] sm:$0xff]
    %v1095 = vld [vmem:[#allocation4 + $0x5e0] sm:$0xff]
    %v1096 = vld [vmem:[#allocation4 + $0x5e8] sm:$0xff]
    %v1097 = vld [vmem:[#allocation4 + $0x5f0] sm:$0xff]
    %v1098 = vld [vmem:[#allocation4 + $0x5f8] sm:$0xff]
    %v1099 = vld [vmem:[#allocation4 + $0x600] sm:$0xff]
    %v1100 = vld [vmem:[#allocation4 + $0x608] sm:$0xff]
    %v1101 = vld [vmem:[#allocation4 + $0x610] sm:$0xff]
    %v1102 = vld [vmem:[#allocation4 + $0x618] sm:$0xff]
    %v1103 = vld [vmem:[#allocation4 + $0x620] sm:$0xff]
    %v1104 = vld [vmem:[#allocation4 + $0x628] sm:$0xff]
    %v1105 = vld [vmem:[#allocation4 + $0x630] sm:$0xff]
    %v1106 = vld [vmem:[#allocation4 + $0x638] sm:$0xff]
    %v1107 = vld [vmem:[#allocation4 + $0x640] sm:$0xff]
    %v1108 = vld [vmem:[#allocation4 + $0x648] sm:$0xff]
    %v1109 = vld [vmem:[#allocation4 + $0x650] sm:$0xff]
    %v1110 = vld [vmem:[#allocation4 + $0x658] sm:$0xff]
    %v1111 = vld [vmem:[#allocation4 + $0x660] sm:$0xff]
    %v1112 = vld [vmem:[#allocation4 + $0x668] sm:$0xff]
    %v1113 = vld [vmem:[#allocation4 + $0x670] sm:$0xff]
    %v1114 = vld [vmem:[#allocation4 + $0x678] sm:$0xff]
    %v1115 = vld [vmem:[#allocation4 + $0x680] sm:$0xff]
    %v1116 = vld [vmem:[#allocation4 + $0x688] sm:$0xff]
    %v1117 = vld [vmem:[#allocation4 + $0x690] sm:$0xff]
    %v1118 = vld [vmem:[#allocation4 + $0x698] sm:$0xff]
    %v1119 = vld [vmem:[#allocation4 + $0x6a0] sm:$0xff]
    %v1120 = vld [vmem:[#allocation4 + $0x6a8] sm:$0xff]
    %v1121 = vld [vmem:[#allocation4 + $0x6b0] sm:$0xff]
    %v1122 = vld [vmem:[#allocation4 + $0x6b8] sm:$0xff]
    %v1123 = vld [vmem:[#allocation4 + $0x6c0] sm:$0xff]
    %v1124 = vld [vmem:[#allocation4 + $0x6c8] sm:$0xff]
    %v1125 = vld [vmem:[#allocation4 + $0x6d0] sm:$0xff]
    %v1126 = vld [vmem:[#allocation4 + $0x6d8] sm:$0xff]
    %v1127 = vld [vmem:[#allocation4 + $0x6e0] sm:$0xff]
    %v1128 = vld [vmem:[#allocation4 + $0x6e8] sm:$0xff]
    %v1129 = vld [vmem:[#allocation4 + $0x6f0] sm:$0xff]
    %v1130 = vld [vmem:[#allocation4 + $0x6f8] sm:$0xff]
    %v1131 = vld [vmem:[#allocation4 + $0x700] sm:$0xff]
    %v1132 = vld [vmem:[#allocation4 + $0x708] sm:$0xff]
    %v1133 = vld [vmem:[#allocation4 + $0x710] sm:$0xff]
    %v1134 = vld [vmem:[#allocation4 + $0x718] sm:$0xff]
    %v1135 = vld [vmem:[#allocation4 + $0x720] sm:$0xff]
    %v1136 = vld [vmem:[#allocation4 + $0x728] sm:$0xff]
    %v1137 = vld [vmem:[#allocation4 + $0x730] sm:$0xff]
    %v1138 = vld [vmem:[#allocation4 + $0x738] sm:$0xff]
    %v1139 = vld [vmem:[#allocation4 + $0x740] sm:$0xff]
    %v1140 = vld [vmem:[#allocation4 + $0x748] sm:$0xff]
    %v1141 = vld [vmem:[#allocation4 + $0x750] sm:$0xff]
    %v1142 = vld [vmem:[#allocation4 + $0x758] sm:$0xff]
    %v1143 = vld [vmem:[#allocation4 + $0x760] sm:$0xff]
    %v1144 = vld [vmem:[#allocation4 + $0x768] sm:$0xff]
    %v1145 = vld [vmem:[#allocation4 + $0x770] sm:$0xff]
    %v1146 = vld [vmem:[#allocation4 + $0x778] sm:$0xff]
    %1147 = vmatprep.subr.mxu0 %v908
    %1148 = vmatpush1.msra.mxu0 %v907
    %1149 = vmatprep.subr.mxu0 %v913
    %1150 = vmatpush1.msra.mxu0 %v912
    %1151 = vmatprep.subr.mxu0 %v918
    %1152 = vmatpush1.msra.mxu0 %v917
    %1153 = vmatprep.subr.mxu0 %v923
    %1154 = vmatpush1.msra.mxu0 %v922
    %1155 = vmatprep.subr.mxu0 %v928
    %1156 = vmatpush1.msra.mxu0 %v927
    %1157 = vmatprep.subr.mxu0 %v933
    %1158 = vmatpush1.msra.mxu0 %v932
    %1159 = vmatprep.subr.mxu0 %v938
    %1160 = vmatpush1.msra.mxu0 %v937
    %1161 = vmatprep.subr.mxu0 %v943
    %1162 = vmatpush1.msra.mxu0 %v942
    %1163 = vmatprep.subr.mxu0 %v948
    %1164 = vmatpush1.msra.mxu0 %v947
    %1165 = vmatprep.subr.mxu0 %v953
    %1166 = vmatpush1.msra.mxu0 %v952
    %1167 = vmatprep.subr.mxu0 %v958
    %1168 = vmatpush1.msra.mxu0 %v957
    %1169 = vmatprep.subr.mxu0 %v963
    %1170 = vmatpush1.msra.mxu0 %v962
    %1171 = vmatprep.subr.mxu0 %v968
    %1172 = vmatpush1.msra.mxu0 %v967
    %1173 = vmatprep.subr.mxu0 %v973
    %1174 = vmatpush1.msra.mxu0 %v972
    %1175 = vmatprep.subr.mxu0 %v978
    %1176 = vmatpush1.msra.mxu0 %v977
    %1177 = vmatprep.subr.mxu0 %v983
    %1178 = vmatpush1.msra.mxu0 %v982
    %1179 = vmatprep.subr.mxu0 %v988
    %1180 = vmatpush1.msra.mxu0 %v987
    %1181 = vmatprep.subr.mxu0 %v993
    %1182 = vmatpush1.msra.mxu0 %v992
    %1183 = vmatprep.subr.mxu0 %v998
    %1184 = vmatpush1.msra.mxu0 %v997
    %1185 = vmatprep.subr.mxu0 %v1003
    %1186 = vmatpush1.msra.mxu0 %v1002
    %1187 = vmatprep.subr.mxu0 %v1008
    %1188 = vmatpush1.msra.mxu0 %v1007
    %1189 = vmatprep.subr.mxu0 %v1013
    %1190 = vmatpush1.msra.mxu0 %v1012
    %1191 = vmatprep.subr.mxu0 %v1018
    %1192 = vmatpush1.msra.mxu0 %v1017
    %1193 = vmatprep.subr.mxu0 %v1023
    %1194 = vmatpush1.msra.mxu0 %v1022
    %1195 = vmatprep.subr.mxu0 %v1028
    %1196 = vmatpush1.msra.mxu0 %v1027
    %1197 = vmatprep.subr.mxu0 %v1033
    %1198 = vmatpush1.msra.mxu0 %v1032
    %1199 = vmatprep.subr.mxu0 %v1038
    %1200 = vmatpush1.msra.mxu0 %v1037
    %1201 = vmatprep.subr.mxu0 %v1043
    %1202 = vmatpush1.msra.mxu0 %v1042
    %1203 = vmatprep.subr.mxu0 %v1048
    %1204 = vmatpush1.msra.mxu0 %v1047
    %1205 = vmatprep.subr.mxu0 %v1053
    %1206 = vmatpush1.msra.mxu0 %v1052
    %1207 = vmatprep.subr.mxu0 %v1058
    %1208 = vmatpush1.msra.mxu0 %v1057
    %1209 = vmatprep.subr.mxu0 %v1063
    %1210 = vmatpush1.msra.mxu0 %v1062
    %1211 = vmatprep.mubr.f32.mxu0 %v237
    %1212 = vmatmul.mubr.f32.gmra.mrb[0].mxu0 %v906
    %v1213 = vpop.f32.mrb[0].mxu0
    %v1214 = vadd.f32 0.0, %v1213
    %v1215 = vpop.f32.mrb[0].mxu0
    %v1216 = vadd.f32 0.0, %v1215
    %1217 = vdwg.mxu0
    %1218 = vmatprep.subr.mxu0 %v1068
    %1219 = vmatpush1.msra.mxu0 %v1067
    %1220 = vmatprep.subr.mxu0 %v1073
    %1221 = vmatpush1.msra.mxu0 %v1072
    %1222 = vmatprep.subr.mxu0 %v1078
    %1223 = vmatpush1.msra.mxu0 %v1077
    %1224 = vmatprep.subr.mxu0 %v1083
    %1225 = vmatpush1.msra.mxu0 %v1082
    %1226 = vmatprep.subr.mxu0 %v1088
    %1227 = vmatpush1.msra.mxu0 %v1087
    %1228 = vmatprep.subr.mxu0 %v1093
    %1229 = vmatpush1.msra.mxu0 %v1092
    %1230 = vmatprep.subr.mxu0 %v1098
    %1231 = vmatpush1.msra.mxu0 %v1097
    %1232 = vmatprep.subr.mxu0 %v1103
    %1233 = vmatpush1.msra.mxu0 %v1102
    %1234 = vmatprep.subr.mxu0 %v1108
    %1235 = vmatpush1.msra.mxu0 %v1107
    %1236 = vmatprep.subr.mxu0 %v1113
    %1237 = vmatpush1.msra.mxu0 %v1112
    %1238 = vmatprep.subr.mxu0 %v1118
    %1239 = vmatpush1.msra.mxu0 %v1117
    %1240 = vmatprep.subr.mxu0 %v1123
    %1241 = vmatpush1.msra.mxu0 %v1122
    %1242 = vmatprep.subr.mxu0 %v1128
    %1243 = vmatpush1.msra.mxu0 %v1127
    %1244 = vmatprep.subr.mxu0 %v1133
    %1245 = vmatpush1.msra.mxu0 %v1132
    %1246 = vmatprep.subr.mxu0 %v1138
    %1247 = vmatpush1.msra.mxu0 %v1137
    %1248 = vmatprep.subr.mxu0 %v1143
    %1249 = vmatpush1.msra.mxu0 %v1142
    %1250 = vmatprep.subr.mxu0 0.0
    %1251 = vmatpush1.msra.mxu0 0.0
    %1252 = vmatprep.subr.mxu0 0.0
    %1253 = vmatpush1.msra.mxu0 0.0
    %1254 = vmatprep.subr.mxu0 0.0
    %1255 = vmatpush1.msra.mxu0 0.0
    %1256 = vmatprep.subr.mxu0 0.0
    %1257 = vmatpush1.msra.mxu0 0.0
    %1258 = vmatprep.subr.mxu0 0.0
    %1259 = vmatpush1.msra.mxu0 0.0
    %1260 = vmatprep.subr.mxu0 0.0
    %1261 = vmatpush1.msra.mxu0 0.0
    %1262 = vmatprep.subr.mxu0 0.0
    %1263 = vmatpush1.msra.mxu0 0.0
    %1264 = vmatprep.subr.mxu0 0.0
    %1265 = vmatpush1.msra.mxu0 0.0
    %1266 = vmatprep.subr.mxu0 0.0
    %1267 = vmatpush1.msra.mxu0 0.0
    %1268 = vmatprep.subr.mxu0 0.0
    %1269 = vmatpush1.msra.mxu0 0.0
    %1270 = vmatprep.subr.mxu0 0.0
    %1271 = vmatpush1.msra.mxu0 0.0
    %1272 = vmatprep.subr.mxu0 0.0
    %1273 = vmatpush1.msra.mxu0 0.0
    %1274 = vmatprep.subr.mxu0 0.0
    %1275 = vmatpush1.msra.mxu0 0.0
    %1276 = vmatprep.subr.mxu0 0.0
    %1277 = vmatpush1.msra.mxu0 0.0
    %1278 = vmatprep.subr.mxu0 0.0
    %1279 = vmatpush1.msra.mxu0 0.0
    %1280 = vmatprep.subr.mxu0 0.0
    %1281 = vmatpush1.msra.mxu0 0.0
    %1282 = vmatprep.mubr.f32.mxu0 0.0
    %1283 = vmatmul.mubr.f32.gmra.mrb[0].mxu0 %v61
    %v1284 = vpop.f32.mrb[0].mxu0
    %v1285 = vadd.f32 %v1214, %v1284
    %v1286 = vpop.f32.mrb[0].mxu0
    %v1287 = vadd.f32 %v1216, %v1286
    %1288 = vdwg.mxu0
    %1289 = vmatprep.subr.mxu0 %v910
    %1290 = vmatpush1.msra.mxu0 %v909
    %1291 = vmatprep.subr.mxu0 %v915
    %1292 = vmatpush1.msra.mxu0 %v914
    %1293 = vmatprep.subr.mxu0 %v920
    %1294 = vmatpush1.msra.mxu0 %v919
    %1295 = vmatprep.subr.mxu0 %v925
    %1296 = vmatpush1.msra.mxu0 %v924
    %1297 = vmatprep.subr.mxu0 %v930
    %1298 = vmatpush1.msra.mxu0 %v929
    %1299 = vmatprep.subr.mxu0 %v935
    %1300 = vmatpush1.msra.mxu0 %v934
    %1301 = vmatprep.subr.mxu0 %v940
    %1302 = vmatpush1.msra.mxu0 %v939
    %1303 = vmatprep.subr.mxu0 %v945
    %1304 = vmatpush1.msra.mxu0 %v944
    %1305 = vmatprep.subr.mxu0 %v950
    %1306 = vmatpush1.msra.mxu0 %v949
    %1307 = vmatprep.subr.mxu0 %v955
    %1308 = vmatpush1.msra.mxu0 %v954
    %1309 = vmatprep.subr.mxu0 %v960
    %1310 = vmatpush1.msra.mxu0 %v959
    %1311 = vmatprep.subr.mxu0 %v965
    %1312 = vmatpush1.msra.mxu0 %v964
    %1313 = vmatprep.subr.mxu0 %v970
    %1314 = vmatpush1.msra.mxu0 %v969
    %1315 = vmatprep.subr.mxu0 %v975
    %1316 = vmatpush1.msra.mxu0 %v974
    %1317 = vmatprep.subr.mxu0 %v980
    %1318 = vmatpush1.msra.mxu0 %v979
    %1319 = vmatprep.subr.mxu0 %v985
    %1320 = vmatpush1.msra.mxu0 %v984
    %1321 = vmatprep.subr.mxu0 %v990
    %1322 = vmatpush1.msra.mxu0 %v989
    %1323 = vmatprep.subr.mxu0 %v995
    %1324 = vmatpush1.msra.mxu0 %v994
    %1325 = vmatprep.subr.mxu0 %v1000
    %1326 = vmatpush1.msra.mxu0 %v999
    %1327 = vmatprep.subr.mxu0 %v1005
    %1328 = vmatpush1.msra.mxu0 %v1004
    %1329 = vmatprep.subr.mxu0 %v1010
    %1330 = vmatpush1.msra.mxu0 %v1009
    %1331 = vmatprep.subr.mxu0 %v1015
    %1332 = vmatpush1.msra.mxu0 %v1014
    %1333 = vmatprep.subr.mxu0 %v1020
    %1334 = vmatpush1.msra.mxu0 %v1019
    %1335 = vmatprep.subr.mxu0 %v1025
    %1336 = vmatpush1.msra.mxu0 %v1024
    %1337 = vmatprep.subr.mxu0 %v1030
    %1338 = vmatpush1.msra.mxu0 %v1029
    %1339 = vmatprep.subr.mxu0 %v1035
    %1340 = vmatpush1.msra.mxu0 %v1034
    %1341 = vmatprep.subr.mxu0 %v1040
    %1342 = vmatpush1.msra.mxu0 %v1039
    %1343 = vmatprep.subr.mxu0 %v1045
    %1344 = vmatpush1.msra.mxu0 %v1044
    %1345 = vmatprep.subr.mxu0 %v1050
    %1346 = vmatpush1.msra.mxu0 %v1049
    %1347 = vmatprep.subr.mxu0 %v1055
    %1348 = vmatpush1.msra.mxu0 %v1054
    %1349 = vmatprep.subr.mxu0 %v1060
    %1350 = vmatpush1.msra.mxu0 %v1059
    %1351 = vmatprep.subr.mxu0 %v1065
    %1352 = vmatpush1.msra.mxu0 %v1064
    %1353 = vmatprep.mubr.f32.mxu0 %v237
    %1354 = vmatmul.mubr.f32.gmra.mrb[0].mxu0 %v906
    %v1355 = vpop.f32.mrb[0].mxu0
    %v1356 = vadd.f32 0.0, %v1355
    %v1357 = vpop.f32.mrb[0].mxu0
    %v1358 = vadd.f32 0.0, %v1357
    %1359 = vdwg.mxu0
    %1360 = vmatprep.subr.mxu0 %v1070
    %1361 = vmatpush1.msra.mxu0 %v1069
    %1362 = vmatprep.subr.mxu0 %v1075
    %1363 = vmatpush1.msra.mxu0 %v1074
    %1364 = vmatprep.subr.mxu0 %v1080
    %1365 = vmatpush1.msra.mxu0 %v1079
    %1366 = vmatprep.subr.mxu0 %v1085
    %1367 = vmatpush1.msra.mxu0 %v1084
    %1368 = vmatprep.subr.mxu0 %v1090
    %1369 = vmatpush1.msra.mxu0 %v1089
    %1370 = vmatprep.subr.mxu0 %v1095
    %1371 = vmatpush1.msra.mxu0 %v1094
    %1372 = vmatprep.subr.mxu0 %v1100
    %1373 = vmatpush1.msra.mxu0 %v1099
    %1374 = vmatprep.subr.mxu0 %v1105
    %1375 = vmatpush1.msra.mxu0 %v1104
    %1376 = vmatprep.subr.mxu0 %v1110
    %1377 = vmatpush1.msra.mxu0 %v1109
    %1378 = vmatprep.subr.mxu0 %v1115
    %1379 = vmatpush1.msra.mxu0 %v1114
    %1380 = vmatprep.subr.mxu0 %v1120
    %1381 = vmatpush1.msra.mxu0 %v1119
    %1382 = vmatprep.subr.mxu0 %v1125
    %1383 = vmatpush1.msra.mxu0 %v1124
    %1384 = vmatprep.subr.mxu0 %v1130
    %1385 = vmatpush1.msra.mxu0 %v1129
    %1386 = vmatprep.subr.mxu0 %v1135
    %1387 = vmatpush1.msra.mxu0 %v1134
    %1388 = vmatprep.subr.mxu0 %v1140
    %1389 = vmatpush1.msra.mxu0 %v1139
    %1390 = vmatprep.subr.mxu0 %v1145
    %1391 = vmatpush1.msra.mxu0 %v1144
    %1392 = vmatprep.subr.mxu0 0.0
    %1393 = vmatpush1.msra.mxu0 0.0
    %1394 = vmatprep.subr.mxu0 0.0
    %1395 = vmatpush1.msra.mxu0 0.0
    %1396 = vmatprep.subr.mxu0 0.0
    %1397 = vmatpush1.msra.mxu0 0.0
    %1398 = vmatprep.subr.mxu0 0.0
    %1399 = vmatpush1.msra.mxu0 0.0
    %1400 = vmatprep.subr.mxu0 0.0
    %1401 = vmatpush1.msra.mxu0 0.0
    %1402 = vmatprep.subr.mxu0 0.0
    %1403 = vmatpush1.msra.mxu0 0.0
    %1404 = vmatprep.subr.mxu0 0.0
    %1405 = vmatpush1.msra.mxu0 0.0
    %1406 = vmatprep.subr.mxu0 0.0
    %1407 = vmatpush1.msra.mxu0 0.0
    %1408 = vmatprep.subr.mxu0 0.0
    %1409 = vmatpush1.msra.mxu0 0.0
    %1410 = vmatprep.subr.mxu0 0.0
    %1411 = vmatpush1.msra.mxu0 0.0
    %1412 = vmatprep.subr.mxu0 0.0
    %1413 = vmatpush1.msra.mxu0 0.0
    %1414 = vmatprep.subr.mxu0 0.0
    %1415 = vmatpush1.msra.mxu0 0.0
    %1416 = vmatprep.subr.mxu0 0.0
    %1417 = vmatpush1.msra.mxu0 0.0
    %1418 = vmatprep.subr.mxu0 0.0
    %1419 = vmatpush1.msra.mxu0 0.0
    %1420 = vmatprep.subr.mxu0 0.0
    %1421 = vmatpush1.msra.mxu0 0.0
    %1422 = vmatprep.subr.mxu0 0.0
    %1423 = vmatpush1.msra.mxu0 0.0
    %1424 = vmatprep.mubr.f32.mxu0 0.0
    %1425 = vmatmul.mubr.f32.gmra.mrb[0].mxu0 %v61
    %v1426 = vpop.f32.mrb[0].mxu0
    %v1427 = vadd.f32 %v1356, %v1426
    %v1428 = vpop.f32.mrb[0].mxu0
    %v1429 = vadd.f32 %v1358, %v1428
    %1430 = vdwg.mxu0
    %1431 = vmatprep.subr.mxu0 0.0
    %1432 = vmatpush1.msra.mxu0 %v911
    %1433 = vmatprep.subr.mxu0 0.0
    %1434 = vmatpush1.msra.mxu0 %v916
    %1435 = vmatprep.subr.mxu0 0.0
    %1436 = vmatpush1.msra.mxu0 %v921
    %1437 = vmatprep.subr.mxu0 0.0
    %1438 = vmatpush1.msra.mxu0 %v926
    %1439 = vmatprep.subr.mxu0 0.0
    %1440 = vmatpush1.msra.mxu0 %v931
    %1441 = vmatprep.subr.mxu0 0.0
    %1442 = vmatpush1.msra.mxu0 %v936
    %1443 = vmatprep.subr.mxu0 0.0
    %1444 = vmatpush1.msra.mxu0 %v941
    %1445 = vmatprep.subr.mxu0 0.0
    %1446 = vmatpush1.msra.mxu0 %v946
    %1447 = vmatprep.subr.mxu0 0.0
    %1448 = vmatpush1.msra.mxu0 %v951
    %1449 = vmatprep.subr.mxu0 0.0
    %1450 = vmatpush1.msra.mxu0 %v956
    %1451 = vmatprep.subr.mxu0 0.0
    %1452 = vmatpush1.msra.mxu0 %v961
    %1453 = vmatprep.subr.mxu0 0.0
    %1454 = vmatpush1.msra.mxu0 %v966
    %1455 = vmatprep.subr.mxu0 0.0
    %1456 = vmatpush1.msra.mxu0 %v971
    %1457 = vmatprep.subr.mxu0 0.0
    %1458 = vmatpush1.msra.mxu0 %v976
    %1459 = vmatprep.subr.mxu0 0.0
    %1460 = vmatpush1.msra.mxu0 %v981
    %1461 = vmatprep.subr.mxu0 0.0
    %1462 = vmatpush1.msra.mxu0 %v986
    %1463 = vmatprep.subr.mxu0 0.0
    %1464 = vmatpush1.msra.mxu0 %v991
    %1465 = vmatprep.subr.mxu0 0.0
    %1466 = vmatpush1.msra.mxu0 %v996
    %1467 = vmatprep.subr.mxu0 0.0
    %1468 = vmatpush1.msra.mxu0 %v1001
    %1469 = vmatprep.subr.mxu0 0.0
    %1470 = vmatpush1.msra.mxu0 %v1006
    %1471 = vmatprep.subr.mxu0 0.0
    %1472 = vmatpush1.msra.mxu0 %v1011
    %1473 = vmatprep.subr.mxu0 0.0
    %1474 = vmatpush1.msra.mxu0 %v1016
    %1475 = vmatprep.subr.mxu0 0.0
    %1476 = vmatpush1.msra.mxu0 %v1021
    %1477 = vmatprep.subr.mxu0 0.0
    %1478 = vmatpush1.msra.mxu0 %v1026
    %1479 = vmatprep.subr.mxu0 0.0
    %1480 = vmatpush1.msra.mxu0 %v1031
    %1481 = vmatprep.subr.mxu0 0.0
    %1482 = vmatpush1.msra.mxu0 %v1036
    %1483 = vmatprep.subr.mxu0 0.0
    %1484 = vmatpush1.msra.mxu0 %v1041
    %1485 = vmatprep.subr.mxu0 0.0
    %1486 = vmatpush1.msra.mxu0 %v1046
    %1487 = vmatprep.subr.mxu0 0.0
    %1488 = vmatpush1.msra.mxu0 %v1051
    %1489 = vmatprep.subr.mxu0 0.0
    %1490 = vmatpush1.msra.mxu0 %v1056
    %1491 = vmatprep.subr.mxu0 0.0
    %1492 = vmatpush1.msra.mxu0 %v1061
    %1493 = vmatprep.subr.mxu0 0.0
    %1494 = vmatpush1.msra.mxu0 %v1066
    %1495 = vmatprep.mubr.f32.mxu0 %v237
    %1496 = vmatmul.mubr.f32.gmra.mrb[0].mxu0 %v906
    %v1497 = vpop.f32.mrb[0].mxu0
    %v1498 = vadd.f32 0.0, %v1497
    %v1499 = vpop.f32.mrb[0].mxu0
    %1500 = vdwg.mxu0
    %1501 = vmatprep.subr.mxu0 0.0
    %1502 = vmatpush1.msra.mxu0 %v1071
    %1503 = vmatprep.subr.mxu0 0.0
    %1504 = vmatpush1.msra.mxu0 %v1076
    %1505 = vmatprep.subr.mxu0 0.0
    %1506 = vmatpush1.msra.mxu0 %v1081
    %1507 = vmatprep.subr.mxu0 0.0
    %1508 = vmatpush1.msra.mxu0 %v1086
    %1509 = vmatprep.subr.mxu0 0.0
    %1510 = vmatpush1.msra.mxu0 %v1091
    %1511 = vmatprep.subr.mxu0 0.0
    %1512 = vmatpush1.msra.mxu0 %v1096
    %1513 = vmatprep.subr.mxu0 0.0
    %1514 = vmatpush1.msra.mxu0 %v1101
    %1515 = vmatprep.subr.mxu0 0.0
    %1516 = vmatpush1.msra.mxu0 %v1106
    %1517 = vmatprep.subr.mxu0 0.0
    %1518 = vmatpush1.msra.mxu0 %v1111
    %1519 = vmatprep.subr.mxu0 0.0
    %1520 = vmatpush1.msra.mxu0 %v1116
    %1521 = vmatprep.subr.mxu0 0.0
    %1522 = vmatpush1.msra.mxu0 %v1121
    %1523 = vmatprep.subr.mxu0 0.0
    %1524 = vmatpush1.msra.mxu0 %v1126
    %1525 = vmatprep.subr.mxu0 0.0
    %1526 = vmatpush1.msra.mxu0 %v1131
    %1527 = vmatprep.subr.mxu0 0.0
    %1528 = vmatpush1.msra.mxu0 %v1136
    %1529 = vmatprep.subr.mxu0 0.0
    %1530 = vmatpush1.msra.mxu0 %v1141
    %1531 = vmatprep.subr.mxu0 0.0
    %1532 = vmatpush1.msra.mxu0 %v1146
    %1533 = vmatprep.subr.mxu0 0.0
    %1534 = vmatpush1.msra.mxu0 0.0
    %1535 = vmatprep.subr.mxu0 0.0
    %1536 = vmatpush1.msra.mxu0 0.0
    %1537 = vmatprep.subr.mxu0 0.0
    %1538 = vmatpush1.msra.mxu0 0.0
    %1539 = vmatprep.subr.mxu0 0.0
    %1540 = vmatpush1.msra.mxu0 0.0
    %1541 = vmatprep.subr.mxu0 0.0
    %1542 = vmatpush1.msra.mxu0 0.0
    %1543 = vmatprep.subr.mxu0 0.0
    %1544 = vmatpush1.msra.mxu0 0.0
    %1545 = vmatprep.subr.mxu0 0.0
    %1546 = vmatpush1.msra.mxu0 0.0
    %1547 = vmatprep.subr.mxu0 0.0
    %1548 = vmatpush1.msra.mxu0 0.0
    %1549 = vmatprep.subr.mxu0 0.0
    %1550 = vmatpush1.msra.mxu0 0.0
    %1551 = vmatprep.subr.mxu0 0.0
    %1552 = vmatpush1.msra.mxu0 0.0
    %1553 = vmatprep.subr.mxu0 0.0
    %1554 = vmatpush1.msra.mxu0 0.0
    %1555 = vmatprep.subr.mxu0 0.0
    %1556 = vmatpush1.msra.mxu0 0.0
    %1557 = vmatprep.subr.mxu0 0.0
    %1558 = vmatpush1.msra.mxu0 0.0
    %1559 = vmatprep.subr.mxu0 0.0
    %1560 = vmatpush1.msra.mxu0 0.0
    %1561 = vmatprep.subr.mxu0 0.0
    %1562 = vmatpush1.msra.mxu0 0.0
    %1563 = vmatprep.subr.mxu0 0.0
    %1564 = vmatpush1.msra.mxu0 0.0
    %1565 = vmatprep.mubr.f32.mxu0 0.0
    %1566 = vmatmul.mubr.f32.gmra.mrb[0].mxu0 %v61
    %v1567 = vpop.f32.mrb[0].mxu0
    %v1568 = vadd.f32 %v1498, %v1567
    %v1569 = vpop.f32.mrb[0].mxu0
    %1570 = vdwg.mxu0
    %v1571 = vxor.u32 %v1285, 2147483648
    %v1572 = vmul.f32 %v1571, 1.442695
    %v1573 = vpow.pop %v1572
    %v1574 = vadd.f32 %v1573, 1.0
    %v1575 = vrcp.pop %v1574
    %v1576 = vmul.f32 1.0, %v1575
    %v1577 = vxor.u32 %v1287, 2147483648
    %v1578 = vmul.f32 %v1577, 1.442695
    %v1579 = vpow.pop %v1578
    %v1580 = vadd.f32 %v1579, 1.0
    %v1581 = vrcp.pop %v1580
    %v1582 = vmul.f32 1.0, %v1581
    %v1583 = vxor.u32 %v1427, 2147483648
    %v1584 = vmul.f32 %v1583, 1.442695
    %v1585 = vpow.pop %v1584
    %v1586 = vadd.f32 %v1585, 1.0
    %v1587 = vrcp.pop %v1586
    %v1588 = vmul.f32 1.0, %v1587
    %v1589 = vxor.u32 %v1429, 2147483648
    %v1590 = vmul.f32 %v1589, 1.442695
    %v1591 = vpow.pop %v1590
    %v1592 = vadd.f32 %v1591, 1.0
    %v1593 = vrcp.pop %v1592
    %v1594 = vmul.f32 1.0, %v1593
    %v1595 = vtanh.pop %v1568
    %v1596 = vmul.f32 %v1582, %v62
    %v1597 = vmul.f32 %v1576, %v1595
    %v1598 = vadd.f32 %v1596, %v1597
    %v1599 = vmul.f32 %v1594, %v500
    %v1600 = vadd.f32 %v1598, %v1599
    %v1601 = vtanh.pop %v1600
    %v1602 = vmul.f32 %v1588, %v1601
    %v1603 = vld [vmem:[#allocation6 + $0x190] sm:$0xff]
    %v1604 = vld [vmem:[#allocation6 + $0x198] sm:$0xff]
    %v1605 = vld [vmem:[#allocation6 + $0x1a0] sm:$0xff]
    %v1606 = vld [vmem:[#allocation6 + $0x1a8] sm:$0xff]
    %v1607 = vld [vmem:[#allocation6 + $0x1b0] sm:$0xff]
    %v1608 = vld [vmem:[#allocation6 + $0x1b8] sm:$0xff]
    %v1609 = vld [vmem:[#allocation6 + $0x1c0] sm:$0xff]
    %v1610 = vld [vmem:[#allocation6 + $0x1c8] sm:$0xff]
    %v1611 = vld [vmem:[#allocation6 + $0x1d0] sm:$0xff]
    %v1612 = vld [vmem:[#allocation6 + $0x1d8] sm:$0xff]
    %v1613 = vld [vmem:[#allocation6 + $0x1e0] sm:$0xff]
    %v1614 = vld [vmem:[#allocation6 + $0x1e8] sm:$0xff]
    %v1615 = vld [vmem:[#allocation6 + $0x1f0] sm:$0xff]
    %v1616 = vld [vmem:[#allocation6 + $0x1f8] sm:$0xff]
    %v1617 = vld [vmem:[#allocation6 + $0x200] sm:$0xff]
    %v1618 = vld [vmem:[#allocation6 + $0x208] sm:$0xff]
    %v1619 = vld [vmem:[#allocation6 + $0x210] sm:$0x1]
    %1620 = vmatprep.subr.mxu0 0.0
    %1621 = vmatpush1.msra.mxu0 %v1603
    %1622 = vmatprep.subr.mxu0 0.0
    %1623 = vmatpush1.msra.mxu0 %v1604
    %1624 = vmatprep.subr.mxu0 0.0
    %1625 = vmatpush1.msra.mxu0 %v1605
    %1626 = vmatprep.subr.mxu0 0.0
    %1627 = vmatpush1.msra.mxu0 %v1606
    %1628 = vmatprep.subr.mxu0 0.0
    %1629 = vmatpush1.msra.mxu0 %v1607
    %1630 = vmatprep.subr.mxu0 0.0
    %1631 = vmatpush1.msra.mxu0 %v1608
    %1632 = vmatprep.subr.mxu0 0.0
    %1633 = vmatpush1.msra.mxu0 %v1609
    %1634 = vmatprep.subr.mxu0 0.0
    %1635 = vmatpush1.msra.mxu0 %v1610
    %1636 = vmatprep.subr.mxu0 0.0
    %1637 = vmatpush1.msra.mxu0 %v1611
    %1638 = vmatprep.subr.mxu0 0.0
    %1639 = vmatpush1.msra.mxu0 %v1612
    %1640 = vmatprep.subr.mxu0 0.0
    %1641 = vmatpush1.msra.mxu0 %v1613
    %1642 = vmatprep.subr.mxu0 0.0
    %1643 = vmatpush1.msra.mxu0 %v1614
    %1644 = vmatprep.subr.mxu0 0.0
    %1645 = vmatpush1.msra.mxu0 %v1615
    %1646 = vmatprep.subr.mxu0 0.0
    %1647 = vmatpush1.msra.mxu0 %v1616
    %1648 = vmatprep.subr.mxu0 0.0
    %1649 = vmatpush1.msra.mxu0 %v1617
    %1650 = vmatprep.subr.mxu0 0.0
    %1651 = vmatpush1.msra.mxu0 %v1618
    %1652 = vmatprep.subr.mxu0 0.0
    %1653 = vmatpush1.msra.mxu0 0.0
    %1654 = vmatprep.subr.mxu0 0.0
    %1655 = vmatpush1.msra.mxu0 0.0
    %1656 = vmatprep.subr.mxu0 0.0
    %1657 = vmatpush1.msra.mxu0 0.0
    %1658 = vmatprep.subr.mxu0 0.0
    %1659 = vmatpush1.msra.mxu0 0.0
    %1660 = vmatprep.subr.mxu0 0.0
    %1661 = vmatpush1.msra.mxu0 0.0
    %1662 = vmatprep.subr.mxu0 0.0
    %1663 = vmatpush1.msra.mxu0 0.0
    %1664 = vmatprep.subr.mxu0 0.0
    %1665 = vmatpush1.msra.mxu0 0.0
    %1666 = vmatprep.subr.mxu0 0.0
    %1667 = vmatpush1.msra.mxu0 0.0
    %1668 = vmatprep.subr.mxu0 0.0
    %1669 = vmatpush1.msra.mxu0 0.0
    %1670 = vmatprep.subr.mxu0 0.0
    %1671 = vmatpush1.msra.mxu0 0.0
    %1672 = vmatprep.subr.mxu0 0.0
    %1673 = vmatpush1.msra.mxu0 0.0
    %1674 = vmatprep.subr.mxu0 0.0
    %1675 = vmatpush1.msra.mxu0 0.0
    %1676 = vmatprep.subr.mxu0 0.0
    %1677 = vmatpush1.msra.mxu0 0.0
    %1678 = vmatprep.subr.mxu0 0.0
    %1679 = vmatpush1.msra.mxu0 0.0
    %1680 = vmatprep.subr.mxu0 0.0
    %1681 = vmatpush1.msra.mxu0 0.0
    %1682 = vmatprep.subr.mxu0 0.0
    %1683 = vmatpush1.msra.mxu0 0.0
    %1684 = vmatprep.mubr.f32.mxu0 0.0
    %1685 = vmatmul.mubr.f32.gmra.mrb[0].mxu0 %v1602
    %v1686 = vpop.f32.mrb[0].mxu0
    %v1687 = vadd.f32 %v1619, %v1686
    %v1688 = vpop.f32.mrb[0].mxu0
    %1689 = vdwg.mxu0
    %1690 = vst [vmem:[%s4] sm:$0x1] %v1687
    %1691 = vst [vmem:[%s4 + $0x1] sm:$0x1] %v906
    %1692 = vst [vmem:[%s4 + $0x2] sm:$0x1] %v904
    %1693 = vst [vmem:[%s4 + $0x3] sm:$0x1] %v1602
    %1694 = vst [vmem:[%s4 + $0x4] sm:$0x1] %v1600
    %1695 = vst [vmem:[%s4 + $0x5] sm:$0x7] 0.0
    // Predicated region
    $region30: #{a3c_dnd_forward.1} parent=1 // pred_check
      _
    $region31: #{a3c_dnd_forward.1} parent=1 // pred_check_branch
      %1697 = sbr.rel (0) target = $region33
    $region32: #{a3c_dnd_forward.1} parent=1 // pred_region
      _
    $region33: #{a3c_dnd_forward.1} parent=1 // pred_fallthru
      _
    // Predicated region
    $region34: #{a3c_dnd_forward.1} parent=1 // pred_check
      _
    $region35: #{a3c_dnd_forward.1} parent=1 // pred_check_branch
      %1699 = sbr.rel (0) target = $region37
    $region36: #{a3c_dnd_forward.1} parent=1 // pred_region
      _
    $region37: #{a3c_dnd_forward.1} parent=1 // pred_fallthru
      _
    %1700 = vsyncpa [#allocation3], 1
    %1701 = vsyncpa [#allocation5], 1

</llo_original>
